<compile_context>
chip_gen: v5e
topology: v5e:2x2
jax: 0.10.0
libtpu: 0.0.40
codegen_flags: <defaults>
</compile_context>

<pallas_src>
import functools

import jax
import jax.numpy as jnp
from jax.experimental import pallas as pl
from jax.experimental.pallas import tpu as pltpu

LN_EPS = 1e-5          # PyTorch nn.LayerNorm default
NEG_INF_LOGIT = -1e30  # baked into padded b3 lanes


def _round_up(n, m):
    return ((n + m - 1) // m) * m


def _cdiv(a, b):
    return (a + b - 1) // b


def _layernorm_fused(h, gamma, beta, n_real):
    """One-pass LayerNorm over the last axis.

    Padded lanes of `h` are exactly zero (zero-padded weights and biases), so
    sums over the padded width equal sums over the real `n_real` features; mean
    and E[h^2] come from a single reduction pass and var = E[h^2] - mu^2.
    gamma/beta are zero on padded lanes so padded outputs stay exactly zero.
    """
    inv_n = 1.0 / float(n_real)
    s1 = jnp.sum(h, axis=-1, keepdims=True)
    s2 = jnp.sum(h * h, axis=-1, keepdims=True)
    mu = s1 * inv_n
    var = jnp.maximum(s2 * inv_n - mu * mu, 0.0)
    return (h - mu) * jax.lax.rsqrt(var + LN_EPS) * gamma + beta


def dense_model_kernel(x_ref, w1_ref, w2_ref, w3_ref, vec_ref, o_ref,
                       h_ref, m_ref, l_ref,
                       *, hidden, hid_pad, out_tile, matmul_dtype):
    """Grid = (batch tiles [parallel], out_dim tiles [arbitrary, last])."""
    f32 = jnp.float32
    j = pl.program_id(1)

    # ---- once per batch tile (j == 0): dense blocks 1 & 2 -> h scratch ----
    @pl.when(j == 0)
    def _():
        vec = vec_ref[...]  # rows: b1,g1,be1,b2,g2,be2,b3,unused
        b1, g1, be1 = vec[0:1, :hid_pad], vec[1:2, :hid_pad], vec[2:3, :hid_pad]
        b2, g2, be2 = vec[3:4, :hid_pad], vec[4:5, :hid_pad], vec[5:6, :hid_pad]

        # Linear -> LayerNorm -> ReLU (dropout p=0.1 is identity in eval mode)
        h = jnp.dot(x_ref[...], w1_ref[...], preferred_element_type=f32) + b1
        h = _layernorm_fused(h, g1, be1, hidden)
        h = jnp.maximum(h, 0.0)

        h = jnp.dot(h.astype(matmul_dtype), w2_ref[...],
                    preferred_element_type=f32) + b2
        h = _layernorm_fused(h, g2, be2, hidden)
        h = jnp.maximum(h, 0.0)

        h_ref[...] = h.astype(matmul_dtype)
        m_ref[...] = jnp.full_like(m_ref, -jnp.inf)
        l_ref[...] = jnp.zeros_like(l_ref)

    # ---- per out tile: Linear column slab + online logsumexp ----
    col = pl.multiple_of(j * out_tile, out_tile)
    # b3 slab; padded lanes already hold NEG_INF_LOGIT (no per-step mask needed).
    b3j = vec_ref[6:7, pl.ds(col, out_tile)]
    logits = jnp.dot(h_ref[...], w3_ref[...], preferred_element_type=f32) + b3j

    m_prev = m_ref[...]
    m_new = jnp.maximum(m_prev, jnp.max(logits, axis=-1, keepdims=True))
    l_ref[...] = (l_ref[...] * jnp.exp(m_prev - m_new)
                  + jnp.sum(jnp.exp(logits - m_new), axis=-1, keepdims=True))
    m_ref[...] = m_new

    # Stash raw logits into the (resident) full-width output block.
    o_ref[:, pl.ds(col, out_tile)] = logits.astype(o_ref.dtype)

    # ---- last out tile: normalize whole block -> log-softmax ----
    @pl.when(j == pl.num_programs(1) - 1)
    def _():
        lse = m_ref[...] + jnp.log(l_ref[...])
        o_ref[...] = (o_ref[...].astype(f32) - lse).astype(o_ref.dtype)


def prepare_params(params, *, matmul_dtype=jnp.bfloat16):
    """One-time preprocessing: pad/cast weights, pack per-feature vectors.

    Run this ONCE (outside the serving loop).  The forward pass then only pads
    the activation `x`, so no weight-sized HBM copy sits on the critical path.
    Weights are stored (in_features, out_features) so the kernel computes
    y = x @ W + b directly on the MXU.
    """
    in_dim, hidden = params["w1"].shape
    out_dim = params["w3"].shape[1]
    in_pad = _round_up(in_dim, 128)
    hid_pad = _round_up(hidden, 128)
    out_pad = _round_up(out_dim, 128)

    w1 = jnp.zeros((in_pad, hid_pad), matmul_dtype).at[:in_dim, :hidden].set(
        params["w1"].astype(matmul_dtype))
    w2 = jnp.zeros((hid_pad, hid_pad), matmul_dtype).at[:hidden, :hidden].set(
        params["w2"].astype(matmul_dtype))
    w3 = jnp.zeros((hid_pad, out_pad), matmul_dtype).at[:hidden, :out_dim].set(
        params["w3"].astype(matmul_dtype))

    # All (1, feat) vectors packed into one (8, W) f32 array -> one DMA.
    vw = max(hid_pad, out_pad)
    vec = jnp.zeros((8, vw), jnp.float32)
    vec = vec.at[0, :hidden].set(params["b1"].reshape(-1))
    vec = vec.at[1, :hidden].set(params["g1"].reshape(-1))
    vec = vec.at[2, :hidden].set(params["be1"].reshape(-1))
    vec = vec.at[3, :hidden].set(params["b2"].reshape(-1))
    vec = vec.at[4, :hidden].set(params["g2"].reshape(-1))
    vec = vec.at[5, :hidden].set(params["be2"].reshape(-1))
    vec = vec.at[6, :out_dim].set(params["b3"].reshape(-1))
    if out_pad > out_dim:
        # Static additive mask: padded logit columns go to -1e30 via the bias add.
        vec = vec.at[6, out_dim:out_pad].set(NEG_INF_LOGIT)

    return {
        "w1": w1, "w2": w2, "w3": w3, "vec": vec,
        "in_dim": in_dim, "hidden": hidden, "out_dim": out_dim,
        "in_pad": in_pad, "hid_pad": hid_pad, "out_pad": out_pad,
        "matmul_dtype": matmul_dtype,
    }


def dense_model_forward(x, prep, *, batch_tile=None, out_tile=None,
                        out_dtype=jnp.float32,
                        vmem_limit_bytes=64 * 1024 * 1024,
                        x_buffer_count=None):
    """x: (B, in_dim) float32.  prep: output of prepare_params().

    Tuning hints:
      v5e: batch_tile=128, x_buffer_count=3, vmem_limit_bytes ~ 96 MiB.
      v6e: batch_tile=256, vmem_limit_bytes ~ 96 MiB (w3 fully resident).
      v7x: batch_tile=128, out_tile=512-1024, keep vmem_limit <= 64 MiB,
           ensure >= 2 batch tiles so both TensorCores get a shard.
    """
    B, in_dim = x.shape
    assert in_dim == prep["in_dim"]
    hidden, out_dim = prep["hidden"], prep["out_dim"]
    in_pad, hid_pad, out_pad = prep["in_pad"], prep["hid_pad"], prep["out_pad"]
    matmul_dtype = prep["matmul_dtype"]
    vw = prep["vec"].shape[1]

    # Batch tile: derived from B so padding waste stays small.
    if batch_tile is None:
        max_tile = 256
        n_tiles = max(1, _cdiv(B, max_tile))
        batch_tile = _round_up(_cdiv(B, n_tiles), 8)
    batch_tile = max(8, _round_up(batch_tile, 8))
    b_pad = _round_up(B, batch_tile)

    # out_dim tile: largest 128-multiple <= 512 that divides out_pad.
    if out_tile is None:
        out_tile = min(out_pad, 512)
        while out_pad % out_tile:
            out_tile -= 128
    assert out_tile % 128 == 0 and out_pad % out_tile == 0

    # Only the activation is padded per call (weights pre-padded in prep).
    x_p = jnp.zeros((b_pad, in_pad), matmul_dtype).at[:B, :in_dim].set(
        x.astype(matmul_dtype))

    kernel = functools.partial(
        dense_model_kernel,
        hidden=hidden, hid_pad=hid_pad, out_tile=out_tile,
        matmul_dtype=matmul_dtype)

    # Grid-invariant inputs: single buffer (nothing to prefetch, halves VMEM).
    resident = dict(pipeline_mode=pl.Buffered(1))
    x_kwargs = {}
    if x_buffer_count is not None:
        x_kwargs["pipeline_mode"] = pl.Buffered(x_buffer_count)

    out = pl.pallas_call(
        kernel,
        out_shape=jax.ShapeDtypeStruct((b_pad, out_pad), out_dtype),
        grid_spec=pltpu.PrefetchScalarGridSpec(
            num_scalar_prefetch=0,
            grid=(b_pad // batch_tile, out_pad // out_tile),
            in_specs=[
                pl.BlockSpec((batch_tile, in_pad), lambda i, j: (i, 0), **x_kwargs),
                pl.BlockSpec((in_pad, hid_pad), lambda i, j: (0, 0), **resident),   # w1
                pl.BlockSpec((hid_pad, hid_pad), lambda i, j: (0, 0), **resident),  # w2
                pl.BlockSpec((hid_pad, out_tile), lambda i, j: (0, j)),             # w3 slab
                pl.BlockSpec((8, vw), lambda i, j: (0, 0), **resident),             # packed vecs
            ],
            # Output block resident across the out axis; normalized on last j.
            out_specs=pl.BlockSpec((batch_tile, out_pad), lambda i, j: (i, 0)),
            scratch_shapes=[
                pltpu.VMEM((batch_tile, hid_pad), matmul_dtype),  # h (post block 2)
                pltpu.VMEM((batch_tile, 1), jnp.float32),         # running max
                pltpu.VMEM((batch_tile, 1), jnp.float32),         # running sum-exp
            ],
        ),
        compiler_params=pltpu.CompilerParams(
            dimension_semantics=("parallel", "arbitrary"),
            vmem_limit_bytes=vmem_limit_bytes,
        ),
    )(x_p, prep["w1"], prep["w2"], prep["w3"], prep["vec"])

    return out[:B, :out_dim]


def init_params(key, in_dim, hidden, out_dim):
    """Deterministic synthetic parameters (PyTorch-style init, pre-transposed)."""
    ks = jax.random.split(key, 6)
    scale1 = 1.0 / jnp.sqrt(in_dim)
    scale2 = 1.0 / jnp.sqrt(hidden)
    return {
        "w1": jax.random.uniform(ks[0], (in_dim, hidden), jnp.float32, -scale1, scale1),
        "b1": jax.random.uniform(ks[1], (hidden,), jnp.float32, -scale1, scale1),
        "g1": jnp.ones((hidden,), jnp.float32),
        "be1": jnp.zeros((hidden,), jnp.float32),
        "w2": jax.random.uniform(ks[2], (hidden, hidden), jnp.float32, -scale2, scale2),
        "b2": jax.random.uniform(ks[3], (hidden,), jnp.float32, -scale2, scale2),
        "g2": jnp.ones((hidden,), jnp.float32),
        "be2": jnp.zeros((hidden,), jnp.float32),
        "w3": jax.random.uniform(ks[4], (hidden, out_dim), jnp.float32, -scale2, scale2),
        "b3": jax.random.uniform(ks[5], (out_dim,), jnp.float32, -scale2, scale2),
    }


def _ln_ref(h, gamma, beta):
    mu = jnp.mean(h, axis=-1, keepdims=True)
    var = jnp.mean((h - mu) ** 2, axis=-1, keepdims=True)
    return (h - mu) * jax.lax.rsqrt(var + LN_EPS) * gamma + beta


def reference_forward(x, p, matmul_dtype=jnp.bfloat16):
    """Plain-JAX reference modelling the kernel's bf16 matmul operands."""
    q = lambda a: a.astype(matmul_dtype).astype(jnp.float32)
    h = q(x) @ q(p["w1"]) + p["b1"]
    h = _ln_ref(h, p["g1"], p["be1"])
    h = jnp.maximum(h, 0.0)
    h = q(h) @ q(p["w2"]) + p["b2"]
    h = _ln_ref(h, p["g2"], p["be2"])
    h = jnp.maximum(h, 0.0)
    logits = q(h) @ q(p["w3"]) + p["b3"]
    return jax.nn.log_softmax(logits, axis=-1)


if __name__ == "__main__":
    key = jax.random.PRNGKey(0)
    k_x, k_p = jax.random.split(key)

    # Small shapes consistent with the module (hidden defaults to 256 in the spec).
    batch, in_dim, hidden, out_dim = 50, 40, 256, 300
    x = jax.random.normal(k_x, (batch, in_dim), jnp.float32)
    params = init_params(k_p, in_dim, hidden, out_dim)

    prep = prepare_params(params)           # one-time: pad + cast weights
    ref = reference_forward(x, params)

    # Default path: single batch tile, single out tile.
    out = jax.block_until_ready(dense_model_forward(x, prep))
    assert out.shape == (batch, out_dim)
    assert jnp.allclose(out, ref, atol=1e-3, rtol=1e-3), "mismatch (default tiling)"

    # Explicitly tiled path: multiple batch tiles (parallel) and out_dim tiles
    # with online logsumexp across the "arbitrary" out axis (v7x-style layout).
    out_t = jax.block_until_ready(
        dense_model_forward(x, prep, batch_tile=16, out_tile=128))
    assert out_t.shape == (batch, out_dim)
    assert jnp.allclose(out_t, ref, atol=1e-3, rtol=1e-3), "mismatch (tiled path)"

    print("KERNEL_OK")
</pallas_src>

<mosaic_0001>
module attributes {stable_mosaic.version = 11 : i64} {
  func.func @dense_model_kernel(%arg0: i32, %arg1: i32, %arg2: memref<56x128xbf16, #tpu.memory_space<vmem>>, %arg3: memref<128x256xbf16, #tpu.memory_space<vmem>>, %arg4: memref<256x256xbf16, #tpu.memory_space<vmem>>, %arg5: memref<256x384xbf16, #tpu.memory_space<vmem>>, %arg6: memref<8x384xf32, #tpu.memory_space<vmem>>, %arg7: memref<56x384xf32, #tpu.memory_space<vmem>>, %arg8: memref<56x256xbf16, #tpu.memory_space<vmem>>, %arg9: memref<56x1xf32, #tpu.memory_space<vmem>>, %arg10: memref<56x1xf32, #tpu.memory_space<vmem>>) attributes {dimension_semantics = [#tpu.dimension_semantics<parallel>, #tpu.dimension_semantics<arbitrary>], iteration_bounds = array<i64: 1, 1>, scalar_prefetch = 0 : i64, scratch_operands = 3 : i64, tpu.core_type = #tpu.core_type<tc>, window_params = [{transform_indices = @transform_0, window_bounds = array<i64: 56, 128>}, {pipeline_mode = #tpu.pipeline_mode<synchronous>, transform_indices = @transform_1, window_bounds = array<i64: 128, 256>}, {pipeline_mode = #tpu.pipeline_mode<synchronous>, transform_indices = @transform_2, window_bounds = array<i64: 256, 256>}, {transform_indices = @transform_3, window_bounds = array<i64: 256, 384>}, {pipeline_mode = #tpu.pipeline_mode<synchronous>, transform_indices = @transform_4, window_bounds = array<i64: 8, 384>}, {transform_indices = @transform_5, window_bounds = array<i64: 56, 384>}]} {
    %c0_i32 = arith.constant 0 : i32
    %0 = arith.cmpi eq, %arg1, %c0_i32 : i32
    %1 = arith.extui %0 : i1 to i32
    %c0_i32_0 = arith.constant 0 : i32
    %2 = arith.cmpi ne, %1, %c0_i32_0 : i32
    scf.if %2 {
      %c0_17 = arith.constant 0 : index
      %c0_18 = arith.constant 0 : index
      %33 = vector.load %arg6[%c0_17, %c0_18] : memref<8x384xf32, #tpu.memory_space<vmem>>, vector<8x384xf32>
      %34 = vector.extract_strided_slice %33 {offsets = [0, 0], sizes = [1, 256], strides = [1, 1]} : vector<8x384xf32> to vector<1x256xf32>
      %35 = vector.extract_strided_slice %33 {offsets = [1, 0], sizes = [1, 256], strides = [1, 1]} : vector<8x384xf32> to vector<1x256xf32>
      %36 = vector.extract_strided_slice %33 {offsets = [2, 0], sizes = [1, 256], strides = [1, 1]} : vector<8x384xf32> to vector<1x256xf32>
      %37 = vector.extract_strided_slice %33 {offsets = [3, 0], sizes = [1, 256], strides = [1, 1]} : vector<8x384xf32> to vector<1x256xf32>
      %38 = vector.extract_strided_slice %33 {offsets = [4, 0], sizes = [1, 256], strides = [1, 1]} : vector<8x384xf32> to vector<1x256xf32>
      %39 = vector.extract_strided_slice %33 {offsets = [5, 0], sizes = [1, 256], strides = [1, 1]} : vector<8x384xf32> to vector<1x256xf32>
      %c0_19 = arith.constant 0 : index
      %c0_20 = arith.constant 0 : index
      %40 = vector.load %arg2[%c0_19, %c0_20] : memref<56x128xbf16, #tpu.memory_space<vmem>>, vector<56x128xbf16>
      %c0_21 = arith.constant 0 : index
      %c0_22 = arith.constant 0 : index
      %41 = vector.load %arg3[%c0_21, %c0_22] : memref<128x256xbf16, #tpu.memory_space<vmem>>, vector<128x256xbf16>
      %cst_23 = arith.constant dense<0.000000e+00> : vector<56x256xf32>
      %42 = tpu.matmul %40, %41, %cst_23 {dimension_numbers = #tpu.dot_dimension_numbers<[1], [0], [0], [1], [0, 0, 1, 1], [], []>} : vector<56x128xbf16>, vector<128x256xbf16>, vector<56x256xf32> -> vector<56x256xf32>
      %43 = vector.broadcast %34 : vector<1x256xf32> to vector<56x256xf32>
      %44 = arith.addf %42, %43 : vector<56x256xf32>
      %cst_24 = arith.constant dense<0.000000e+00> : vector<56xf32>
      %45 = vector.multi_reduction <add>, %44, %cst_24 [1] : vector<56x256xf32> to vector<56xf32>
      %46 = vector.shape_cast %45 : vector<56xf32> to vector<56x1xf32>
      %47 = arith.mulf %44, %44 : vector<56x256xf32>
      %cst_25 = arith.constant dense<0.000000e+00> : vector<56xf32>
      %48 = vector.multi_reduction <add>, %47, %cst_25 [1] : vector<56x256xf32> to vector<56xf32>
      %49 = vector.shape_cast %48 : vector<56xf32> to vector<56x1xf32>
      %cst_26 = arith.constant 3.906250e-03 : f32
      %50 = vector.broadcast %cst_26 : f32 to vector<56x1xf32>
      %51 = arith.mulf %46, %50 : vector<56x1xf32>
      %cst_27 = arith.constant 3.906250e-03 : f32
      %52 = vector.broadcast %cst_27 : f32 to vector<56x1xf32>
      %53 = arith.mulf %49, %52 : vector<56x1xf32>
      %54 = arith.mulf %51, %51 : vector<56x1xf32>
      %55 = arith.subf %53, %54 : vector<56x1xf32>
      %cst_28 = arith.constant 0.000000e+00 : f32
      %56 = vector.broadcast %cst_28 : f32 to vector<56x1xf32>
      %57 = arith.maximumf %55, %56 : vector<56x1xf32>
      %58 = vector.broadcast %51 : vector<56x1xf32> to vector<56x256xf32>
      %59 = arith.subf %44, %58 : vector<56x256xf32>
      %cst_29 = arith.constant 9.99999974E-6 : f32
      %60 = vector.broadcast %cst_29 : f32 to vector<56x1xf32>
      %61 = arith.addf %57, %60 : vector<56x1xf32>
      %62 = math.rsqrt %61 : vector<56x1xf32>
      %63 = vector.broadcast %62 : vector<56x1xf32> to vector<56x256xf32>
      %64 = arith.mulf %59, %63 : vector<56x256xf32>
      %65 = vector.broadcast %35 : vector<1x256xf32> to vector<56x256xf32>
      %66 = arith.mulf %64, %65 : vector<56x256xf32>
      %67 = vector.broadcast %36 : vector<1x256xf32> to vector<56x256xf32>
      %68 = arith.addf %66, %67 : vector<56x256xf32>
      %cst_30 = arith.constant 0.000000e+00 : f32
      %69 = vector.broadcast %cst_30 : f32 to vector<56x256xf32>
      %70 = arith.maximumf %68, %69 : vector<56x256xf32>
      %71 = arith.truncf %70 : vector<56x256xf32> to vector<56x256xbf16>
      %c0_31 = arith.constant 0 : index
      %c0_32 = arith.constant 0 : index
      %72 = vector.load %arg4[%c0_31, %c0_32] : memref<256x256xbf16, #tpu.memory_space<vmem>>, vector<256x256xbf16>
      %cst_33 = arith.constant dense<0.000000e+00> : vector<56x256xf32>
      %73 = tpu.matmul %71, %72, %cst_33 {dimension_numbers = #tpu.dot_dimension_numbers<[1], [0], [0], [1], [0, 0, 1, 1], [], []>} : vector<56x256xbf16>, vector<256x256xbf16>, vector<56x256xf32> -> vector<56x256xf32>
      %74 = vector.broadcast %37 : vector<1x256xf32> to vector<56x256xf32>
      %75 = arith.addf %73, %74 : vector<56x256xf32>
      %cst_34 = arith.constant dense<0.000000e+00> : vector<56xf32>
      %76 = vector.multi_reduction <add>, %75, %cst_34 [1] : vector<56x256xf32> to vector<56xf32>
      %77 = vector.shape_cast %76 : vector<56xf32> to vector<56x1xf32>
      %78 = arith.mulf %75, %75 : vector<56x256xf32>
      %cst_35 = arith.constant dense<0.000000e+00> : vector<56xf32>
      %79 = vector.multi_reduction <add>, %78, %cst_35 [1] : vector<56x256xf32> to vector<56xf32>
      %80 = vector.shape_cast %79 : vector<56xf32> to vector<56x1xf32>
      %cst_36 = arith.constant 3.906250e-03 : f32
      %81 = vector.broadcast %cst_36 : f32 to vector<56x1xf32>
      %82 = arith.mulf %77, %81 : vector<56x1xf32>
      %cst_37 = arith.constant 3.906250e-03 : f32
      %83 = vector.broadcast %cst_37 : f32 to vector<56x1xf32>
      %84 = arith.mulf %80, %83 : vector<56x1xf32>
      %85 = arith.mulf %82, %82 : vector<56x1xf32>
      %86 = arith.subf %84, %85 : vector<56x1xf32>
      %cst_38 = arith.constant 0.000000e+00 : f32
      %87 = vector.broadcast %cst_38 : f32 to vector<56x1xf32>
      %88 = arith.maximumf %86, %87 : vector<56x1xf32>
      %89 = vector.broadcast %82 : vector<56x1xf32> to vector<56x256xf32>
      %90 = arith.subf %75, %89 : vector<56x256xf32>
      %cst_39 = arith.constant 9.99999974E-6 : f32
      %91 = vector.broadcast %cst_39 : f32 to vector<56x1xf32>
      %92 = arith.addf %88, %91 : vector<56x1xf32>
      %93 = math.rsqrt %92 : vector<56x1xf32>
      %94 = vector.broadcast %93 : vector<56x1xf32> to vector<56x256xf32>
      %95 = arith.mulf %90, %94 : vector<56x256xf32>
      %96 = vector.broadcast %38 : vector<1x256xf32> to vector<56x256xf32>
      %97 = arith.mulf %95, %96 : vector<56x256xf32>
      %98 = vector.broadcast %39 : vector<1x256xf32> to vector<56x256xf32>
      %99 = arith.addf %97, %98 : vector<56x256xf32>
      %cst_40 = arith.constant 0.000000e+00 : f32
      %100 = vector.broadcast %cst_40 : f32 to vector<56x256xf32>
      %101 = arith.maximumf %99, %100 : vector<56x256xf32>
      %102 = arith.truncf %101 : vector<56x256xf32> to vector<56x256xbf16>
      %c0_41 = arith.constant 0 : index
      %c0_42 = arith.constant 0 : index
      %103 = vector.load %arg8[%c0_41, %c0_42] : memref<56x256xbf16, #tpu.memory_space<vmem>>, vector<56x256xbf16>
      tpu.vector_store %arg8[%c0_41, %c0_42], %102 {strides = array<i32>} : memref<56x256xbf16, #tpu.memory_space<vmem>>, vector<56x256xbf16>,
      %cst_43 = arith.constant 0xFF800000 : f32
      %104 = vector.broadcast %cst_43 : f32 to vector<56x1xf32>
      %c0_44 = arith.constant 0 : index
      %c0_45 = arith.constant 0 : index
      %105 = vector.load %arg9[%c0_44, %c0_45] : memref<56x1xf32, #tpu.memory_space<vmem>>, vector<56x1xf32>
      tpu.vector_store %arg9[%c0_44, %c0_45], %104 {strides = array<i32>} : memref<56x1xf32, #tpu.memory_space<vmem>>, vector<56x1xf32>,
      %cst_46 = arith.constant 0.000000e+00 : f32
      %106 = vector.broadcast %cst_46 : f32 to vector<56x1xf32>
      %c0_47 = arith.constant 0 : index
      %c0_48 = arith.constant 0 : index
      %107 = vector.load %arg10[%c0_47, %c0_48] : memref<56x1xf32, #tpu.memory_space<vmem>>, vector<56x1xf32>
      tpu.vector_store %arg10[%c0_47, %c0_48], %106 {strides = array<i32>} : memref<56x1xf32, #tpu.memory_space<vmem>>, vector<56x1xf32>,
    } else {
    }
    %c384_i32 = arith.constant 384 : i32
    %3 = arith.muli %arg1, %c384_i32 : i32
    %4 = tpu.assume_multiple %3, 384 : i32
    %c6 = arith.constant 6 : index
    %5 = arith.index_cast %4 : i32 to index
    %6 = vector.load %arg6[%c6, %5] : memref<8x384xf32, #tpu.memory_space<vmem>>, vector<1x384xf32>
    %c0 = arith.constant 0 : index
    %c0_1 = arith.constant 0 : index
    %7 = vector.load %arg8[%c0, %c0_1] : memref<56x256xbf16, #tpu.memory_space<vmem>>, vector<56x256xbf16>
    %c0_2 = arith.constant 0 : index
    %c0_3 = arith.constant 0 : index
    %8 = vector.load %arg5[%c0_2, %c0_3] : memref<256x384xbf16, #tpu.memory_space<vmem>>, vector<256x384xbf16>
    %cst = arith.constant dense<0.000000e+00> : vector<56x384xf32>
    %9 = tpu.matmul %7, %8, %cst {dimension_numbers = #tpu.dot_dimension_numbers<[1], [0], [0], [1], [0, 0, 1, 1], [], []>} : vector<56x256xbf16>, vector<256x384xbf16>, vector<56x384xf32> -> vector<56x384xf32>
    %10 = vector.broadcast %6 : vector<1x384xf32> to vector<56x384xf32>
    %11 = arith.addf %9, %10 : vector<56x384xf32>
    %c0_4 = arith.constant 0 : index
    %c0_5 = arith.constant 0 : index
    %12 = vector.load %arg9[%c0_4, %c0_5] : memref<56x1xf32, #tpu.memory_space<vmem>>, vector<56x1xf32>
    %cst_6 = arith.constant dense<0xFF800000> : vector<56xf32>
    %13 = vector.multi_reduction <maximumf>, %11, %cst_6 [1] : vector<56x384xf32> to vector<56xf32>
    %14 = vector.shape_cast %13 : vector<56xf32> to vector<56x1xf32>
    %15 = arith.maximumf %12, %14 : vector<56x1xf32>
    %c0_7 = arith.constant 0 : index
    %c0_8 = arith.constant 0 : index
    %16 = vector.load %arg10[%c0_7, %c0_8] : memref<56x1xf32, #tpu.memory_space<vmem>>, vector<56x1xf32>
    %17 = arith.subf %12, %15 : vector<56x1xf32>
    %18 = math.exp %17 : vector<56x1xf32>
    %19 = arith.mulf %16, %18 : vector<56x1xf32>
    %20 = vector.broadcast %15 : vector<56x1xf32> to vector<56x384xf32>
    %21 = arith.subf %11, %20 : vector<56x384xf32>
    %22 = math.exp %21 : vector<56x384xf32>
    %cst_9 = arith.constant dense<0.000000e+00> : vector<56xf32>
    %23 = vector.multi_reduction <add>, %22, %cst_9 [1] : vector<56x384xf32> to vector<56xf32>
    %24 = vector.shape_cast %23 : vector<56xf32> to vector<56x1xf32>
    %25 = arith.addf %19, %24 : vector<56x1xf32>
    %c0_10 = arith.constant 0 : index
    %c0_11 = arith.constant 0 : index
    %26 = vector.load %arg10[%c0_10, %c0_11] : memref<56x1xf32, #tpu.memory_space<vmem>>, vector<56x1xf32>
    tpu.vector_store %arg10[%c0_10, %c0_11], %25 {strides = array<i32>} : memref<56x1xf32, #tpu.memory_space<vmem>>, vector<56x1xf32>,
    %c0_12 = arith.constant 0 : index
    %c0_13 = arith.constant 0 : index
    %27 = vector.load %arg9[%c0_12, %c0_13] : memref<56x1xf32, #tpu.memory_space<vmem>>, vector<56x1xf32>
    tpu.vector_store %arg9[%c0_12, %c0_13], %15 {strides = array<i32>} : memref<56x1xf32, #tpu.memory_space<vmem>>, vector<56x1xf32>,
    %c0_14 = arith.constant 0 : index
    %28 = arith.index_cast %4 : i32 to index
    %29 = vector.load %arg7[%c0_14, %28] : memref<56x384xf32, #tpu.memory_space<vmem>>, vector<56x384xf32>
    tpu.vector_store %arg7[%c0_14, %28], %11 {strides = array<i32>} : memref<56x384xf32, #tpu.memory_space<vmem>>, vector<56x384xf32>,
    %c0_i32_15 = arith.constant 0 : i32
    %30 = arith.cmpi eq, %arg1, %c0_i32_15 : i32
    %31 = arith.extui %30 : i1 to i32
    %c0_i32_16 = arith.constant 0 : i32
    %32 = arith.cmpi ne, %31, %c0_i32_16 : i32
    scf.if %32 {
      %c0_17 = arith.constant 0 : index
      %c0_18 = arith.constant 0 : index
      %33 = vector.load %arg9[%c0_17, %c0_18] : memref<56x1xf32, #tpu.memory_space<vmem>>, vector<56x1xf32>
      %c0_19 = arith.constant 0 : index
      %c0_20 = arith.constant 0 : index
      %34 = vector.load %arg10[%c0_19, %c0_20] : memref<56x1xf32, #tpu.memory_space<vmem>>, vector<56x1xf32>
      %35 = math.log %34 : vector<56x1xf32>
      %36 = arith.addf %33, %35 : vector<56x1xf32>
      %c0_21 = arith.constant 0 : index
      %c0_22 = arith.constant 0 : index
      %37 = vector.load %arg7[%c0_21, %c0_22] : memref<56x384xf32, #tpu.memory_space<vmem>>, vector<56x384xf32>
      %38 = vector.broadcast %36 : vector<56x1xf32> to vector<56x384xf32>
      %39 = arith.subf %37, %38 : vector<56x384xf32>
      %c0_23 = arith.constant 0 : index
      %c0_24 = arith.constant 0 : index
      %40 = vector.load %arg7[%c0_23, %c0_24] : memref<56x384xf32, #tpu.memory_space<vmem>>, vector<56x384xf32>
      tpu.vector_store %arg7[%c0_23, %c0_24], %39 {strides = array<i32>} : memref<56x384xf32, #tpu.memory_space<vmem>>, vector<56x384xf32>,
    } else {
    }
    return
  }
  func.func @transform_0(%arg0: i32, %arg1: i32) -> (i32, i32) {
    %c0_i32 = arith.constant 0 : i32
    %c0_i32_0 = arith.constant 0 : i32
    return %arg0, %c0_i32 : i32, i32
  }
  func.func @transform_1(%arg0: i32, %arg1: i32) -> (i32, i32) {
    %c0_i32 = arith.constant 0 : i32
    %c0_i32_0 = arith.constant 0 : i32
    %c0_i32_1 = arith.constant 0 : i32
    return %c0_i32, %c0_i32_0 : i32, i32
  }
  func.func @transform_2(%arg0: i32, %arg1: i32) -> (i32, i32) {
    %c0_i32 = arith.constant 0 : i32
    %c0_i32_0 = arith.constant 0 : i32
    %c0_i32_1 = arith.constant 0 : i32
    return %c0_i32, %c0_i32_0 : i32, i32
  }
  func.func @transform_3(%arg0: i32, %arg1: i32) -> (i32, i32) {
    %c0_i32 = arith.constant 0 : i32
    %c0_i32_0 = arith.constant 0 : i32
    return %c0_i32, %arg1 : i32, i32
  }
  func.func @transform_4(%arg0: i32, %arg1: i32) -> (i32, i32) {
    %c0_i32 = arith.constant 0 : i32
    %c0_i32_0 = arith.constant 0 : i32
    %c0_i32_1 = arith.constant 0 : i32
    return %c0_i32, %c0_i32_0 : i32, i32
  }
  func.func @transform_5(%arg0: i32, %arg1: i32) -> (i32, i32) {
    %c0_i32 = arith.constant 0 : i32
    %c0_i32_0 = arith.constant 0 : i32
    return %arg0, %c0_i32 : i32, i32
  }
}

</mosaic_0001>

<llo_original>
// kernel: tpu_custom_call.1
$region0: #{tpu_custom_call.1}
  #allocation0 [shape = 'u32[]', space=smem, size = 0x4, offset = 0x4, fixed_abs, tag = 'smem constant byte address 0x4 - core index']
  #allocation1 [shape = 'u32[72,128]{1,0:T(1,128)}', space=vmem, size = 0x9000, scoped, tag = 'internal scratch']
  #allocation2 [shape = 'bf16[56,256]{1,0:T(8,128)(2,1)}', space=vmem, size = 0x7000, scoped, tag = 'scratch operand']
  #allocation3 [shape = 'f32[56,1]{1,0:T(8,128)}', space=vmem, size = 0x7000, scoped, tag = 'scratch operand']
  #allocation4 [shape = 'f32[56,1]{1,0:T(8,128)}', space=vmem, size = 0x7000, scoped, tag = 'scratch operand']
  %s0 = inlined_call_operand.hbm [shape: bf16[56,128], index: 0, kind: input, shape index: {}]
  %s1 = inlined_call_operand.hbm [shape: bf16[128,256], index: 1, kind: input, shape index: {}]
  %s2 = inlined_call_operand.hbm [shape: bf16[256,256], index: 2, kind: input, shape index: {}]
  %s3 = inlined_call_operand.hbm [shape: bf16[256,384], index: 3, kind: input, shape index: {}]
  %s4 = inlined_call_operand.hbm [shape: f32[8,384], index: 4, kind: input, shape index: {}]
  %s5 = inlined_call_operand.hbm [shape: f32[56,384], index: 5, kind: output, shape index: {}]
  %s6 = sld [smem:[#allocation0]]
  $region58: #{tpu_custom_call.1} parent=0
    _
  %s8 = ssub.s32 1, %s6
  %s9 = scalar_select 0, %s8, %s6
  $region1: #{tpu_custom_call.1} parent=0
    #allocation5 [shape = 'u8[14336]{0}', space=vmem, size = 0x3800, scoped, tag = 'input window, operand 0, single buffered']
    #allocation6 [shape = 's32[1]{0}', space=sflag, size = 0x4, scoped, tag = 'scoped memory for tpu_custom_call.1']
    #allocation7 [shape = 's32[1]{0}', space=sflag, size = 0x4, scoped, tag = 'scoped memory for tpu_custom_call.1']
    #allocation8 [shape = 'u8[65536]{0}', space=vmem, size = 0x10000, scoped, tag = 'input window, operand 1, single buffered']
    #allocation9 [shape = 's32[1]{0}', space=sflag, size = 0x4, scoped, tag = 'scoped memory for tpu_custom_call.1']
    #allocation10 [shape = 'u8[131072]{0}', space=vmem, size = 0x20000, scoped, tag = 'input window, operand 2, single buffered']
    #allocation11 [shape = 'u8[196608]{0}', space=vmem, size = 0x30000, scoped, tag = 'input window, operand 3, single buffered']
    #allocation12 [shape = 's32[1]{0}', space=sflag, size = 0x4, scoped, tag = 'scoped memory for tpu_custom_call.1']
    #allocation13 [shape = 'u8[12288]{0}', space=vmem, size = 0x3000, scoped, tag = 'input window, operand 4, single buffered']
    #allocation14 [shape = 'u8[86016]{0}', space=vmem, size = 0x15000, scoped, tag = 'output window, operand 0, single buffered']
    %10 = vsyncpa [#allocation6], 0
    %11 = vsyncpa [#allocation9], 0
    %12 = vsyncpa [#allocation12], 0
    %13 = vsyncpa [#allocation7], 0
    // Predicated region
    $region2: #{tpu_custom_call.1} parent=1 // pred_check
      _
    $region3: #{tpu_custom_call.1} parent=1 // pred_check_branch
      %15 = sbr.rel (0) target = $region5
    $region4: #{tpu_custom_call.1} parent=1 // pred_region
      %17 = vsyncadd [#allocation6], 0
      %s18 = sshll.u32 %s0, 4
      %s19 = int_to_ptr.hbm [resolvable:$true] %s18
      %s20 = sshll.u32 [#allocation5], 4
      %s21 = int_to_ptr.vmem [resolvable:$true] %s20
      %26 = dma.hbm_to_vmem [thread:$0]  %s19, 448, %s21, [#allocation6], 64, 64, 4
    $region5: #{tpu_custom_call.1} parent=1 // pred_fallthru
      _
    // Predicated region
    $region6: #{tpu_custom_call.1} parent=1 // pred_check
      _
    $region7: #{tpu_custom_call.1} parent=1 // pred_check_branch
      %28 = sbr.rel (0) target = $region9
    $region8: #{tpu_custom_call.1} parent=1 // pred_region
      %30 = vsyncadd [#allocation9], 0
      %s31 = sshll.u32 %s1, 4
      %s32 = int_to_ptr.hbm [resolvable:$true] %s31
      %s33 = sshll.u32 [#allocation8], 4
      %s34 = int_to_ptr.vmem [resolvable:$true] %s33
      %39 = dma.hbm_to_vmem [thread:$0]  %s32, 2048, %s34, [#allocation9], 128, 128, 8
    $region9: #{tpu_custom_call.1} parent=1 // pred_fallthru
      _
    // Predicated region
    $region10: #{tpu_custom_call.1} parent=1 // pred_check
      _
    $region11: #{tpu_custom_call.1} parent=1 // pred_check_branch
      %41 = sbr.rel (0) target = $region13
    $region12: #{tpu_custom_call.1} parent=1 // pred_region
      %43 = vsyncadd [#allocation9], 0
      %s44 = sshll.u32 %s2, 4
      %s45 = int_to_ptr.hbm [resolvable:$true] %s44
      %s46 = sshll.u32 [#allocation10], 4
      %s47 = int_to_ptr.vmem [resolvable:$true] %s46
      %52 = dma.hbm_to_vmem [thread:$0]  %s45, 4096, %s47, [#allocation9], 128, 128, 8
    $region13: #{tpu_custom_call.1} parent=1 // pred_fallthru
      _
    // Predicated region
    $region14: #{tpu_custom_call.1} parent=1 // pred_check
      _
    $region15: #{tpu_custom_call.1} parent=1 // pred_check_branch
      %54 = sbr.rel (0) target = $region17
    $region16: #{tpu_custom_call.1} parent=1 // pred_region
      %56 = vsyncadd [#allocation12], 0
      %s57 = sshll.u32 %s3, 4
      %s58 = int_to_ptr.hbm [resolvable:$true] %s57
      %s59 = sshll.u32 [#allocation11], 4
      %s60 = int_to_ptr.vmem [resolvable:$true] %s59
      %65 = dma.hbm_to_vmem [thread:$0]  %s58, 6144, %s60, [#allocation12], 192, 192, 12
    $region17: #{tpu_custom_call.1} parent=1 // pred_fallthru
      _
    // Predicated region
    $region18: #{tpu_custom_call.1} parent=1 // pred_check
      _
    $region19: #{tpu_custom_call.1} parent=1 // pred_check_branch
      %67 = sbr.rel (0) target = $region21
    $region20: #{tpu_custom_call.1} parent=1 // pred_region
      %69 = vsyncadd [#allocation12], 0
      %s71 = sshll.u32 %s4, 4
      %s72 = int_to_ptr.hbm [resolvable:$true] %s71
      %s73 = sshll.u32 [#allocation13], 4
      %s74 = int_to_ptr.vmem [resolvable:$true] %s73
      %76 = dma.hbm_to_vmem [thread:$0]  %s72, 384, %s74, [#allocation12]
    $region21: #{tpu_custom_call.1} parent=1 // pred_fallthru
      _
    // Predicated region
    $region22: #{tpu_custom_call.1} parent=1 // pred_check
      _
    $region23: #{tpu_custom_call.1} parent=1 // pred_check_branch
      %78 = sbr.rel (0) target = $region25
    $region24: #{tpu_custom_call.1} parent=1 // pred_region
      %80 = dma.done [#allocation6], 448
    $region25: #{tpu_custom_call.1} parent=1 // pred_fallthru
      _
    // Predicated region
    $region26: #{tpu_custom_call.1} parent=1 // pred_check
      _
    $region27: #{tpu_custom_call.1} parent=1 // pred_check_branch
      %82 = sbr.rel (0) target = $region29
    $region28: #{tpu_custom_call.1} parent=1 // pred_region
      %84 = dma.done [#allocation9], 2048
    $region29: #{tpu_custom_call.1} parent=1 // pred_fallthru
      _
    // Predicated region
    $region30: #{tpu_custom_call.1} parent=1 // pred_check
      _
    $region31: #{tpu_custom_call.1} parent=1 // pred_check_branch
      %86 = sbr.rel (0) target = $region33
    $region32: #{tpu_custom_call.1} parent=1 // pred_region
      %88 = dma.done [#allocation9], 4096
    $region33: #{tpu_custom_call.1} parent=1 // pred_fallthru
      _
    // Predicated region
    $region34: #{tpu_custom_call.1} parent=1 // pred_check
      _
    $region35: #{tpu_custom_call.1} parent=1 // pred_check_branch
      %90 = sbr.rel (0) target = $region37
    $region36: #{tpu_custom_call.1} parent=1 // pred_region
      %92 = dma.done [#allocation12], 6144
    $region37: #{tpu_custom_call.1} parent=1 // pred_fallthru
      _
    // Predicated region
    $region38: #{tpu_custom_call.1} parent=1 // pred_check
      _
    $region39: #{tpu_custom_call.1} parent=1 // pred_check_branch
      %94 = sbr.rel (0) target = $region41
    $region40: #{tpu_custom_call.1} parent=1 // pred_region
      %96 = dma.done [#allocation12], 384
    $region41: #{tpu_custom_call.1} parent=1 // pred_fallthru
      _
    %p97 = scmp.eq.s32.totalorder 0, 0
    // Predicated region
    $region42: #{tpu_custom_call.1} parent=1 // pred_check
      %p98 = pneg %p97
    $region43: #{tpu_custom_call.1} parent=1 // pred_check_branch
      %100 = sbr.rel (%p98) target = $region45
    $region44: #{tpu_custom_call.1} parent=1 // pred_region
      %v101 = vld [vmem:[#allocation13] sm:$0xff]
      %v102 = vld [vmem:[#allocation13 + $0x8] sm:$0xff]
      %v103 = vld [vmem:[#allocation5] sm:$0xf]
      %v104 = vld [vmem:[#allocation5 + $0x4] sm:$0xf]
      %v105 = vld [vmem:[#allocation5 + $0x8] sm:$0xf]
      %v106 = vld [vmem:[#allocation5 + $0xc] sm:$0xf]
      %v107 = vld [vmem:[#allocation5 + $0x10] sm:$0xf]
      %v108 = vld [vmem:[#allocation5 + $0x14] sm:$0xf]
      %v109 = vld [vmem:[#allocation5 + $0x18] sm:$0xf]
      %v110 = vld [vmem:[#allocation8] sm:$0xff]
      %v111 = vld [vmem:[#allocation8 + $0x8] sm:$0xff]
      %v112 = vld [vmem:[#allocation8 + $0x10] sm:$0xff]
      %v113 = vld [vmem:[#allocation8 + $0x18] sm:$0xff]
      %v114 = vld [vmem:[#allocation8 + $0x20] sm:$0xff]
      %v115 = vld [vmem:[#allocation8 + $0x28] sm:$0xff]
      %v116 = vld [vmem:[#allocation8 + $0x30] sm:$0xff]
      %v117 = vld [vmem:[#allocation8 + $0x38] sm:$0xff]
      %v118 = vld [vmem:[#allocation8 + $0x40] sm:$0xff]
      %v119 = vld [vmem:[#allocation8 + $0x48] sm:$0xff]
      %v120 = vld [vmem:[#allocation8 + $0x50] sm:$0xff]
      %v121 = vld [vmem:[#allocation8 + $0x58] sm:$0xff]
      %v122 = vld [vmem:[#allocation8 + $0x60] sm:$0xff]
      %v123 = vld [vmem:[#allocation8 + $0x68] sm:$0xff]
      %v124 = vld [vmem:[#allocation8 + $0x70] sm:$0xff]
      %v125 = vld [vmem:[#allocation8 + $0x78] sm:$0xff]
      %v126 = vperm.slane %v101, 0
      %v127 = vperm.slane %v102, 0
      %v135 = vunpack.c.l.b16 %v103
      %v136 = vunpack.c.l.b16 %v104
      %v137 = vunpack.c.l.b16 %v105
      %v138 = vunpack.c.l.b16 %v106
      %v139 = vunpack.c.l.b16 %v107
      %v140 = vunpack.c.l.b16 %v108
      %v141 = vunpack.c.l.b16 %v109
      %v142 = vpack.c.b16 %v136, %v135
      %v143 = vpack.c.b16 %v138, %v137
      %v144 = vpack.c.b16 %v140, %v139
      %v145 = vpack.c.b16 %v141, %v141
      %v166 = vunpack.c.l.b16 %v110
      %v167 = vunpack.c.h.b16 %v110
      %v168 = vunpack.c.l.b16 %v111
      %v169 = vunpack.c.h.b16 %v111
      %v170 = vunpack.c.l.b16 %v112
      %v171 = vunpack.c.h.b16 %v112
      %v172 = vunpack.c.l.b16 %v113
      %v173 = vunpack.c.h.b16 %v113
      %v174 = vunpack.c.l.b16 %v114
      %v175 = vunpack.c.h.b16 %v114
      %v176 = vunpack.c.l.b16 %v115
      %v177 = vunpack.c.h.b16 %v115
      %v178 = vunpack.c.l.b16 %v116
      %v179 = vunpack.c.h.b16 %v116
      %v180 = vunpack.c.l.b16 %v117
      %v181 = vunpack.c.h.b16 %v117
      %v182 = vunpack.c.l.b16 %v118
      %v183 = vunpack.c.h.b16 %v118
      %v184 = vunpack.c.l.b16 %v119
      %v185 = vunpack.c.h.b16 %v119
      %v186 = vunpack.c.l.b16 %v120
      %v187 = vunpack.c.h.b16 %v120
      %v188 = vunpack.c.l.b16 %v121
      %v189 = vunpack.c.h.b16 %v121
      %v190 = vunpack.c.l.b16 %v122
      %v191 = vunpack.c.h.b16 %v122
      %v192 = vunpack.c.l.b16 %v123
      %v193 = vunpack.c.h.b16 %v123
      %v194 = vunpack.c.l.b16 %v124
      %v195 = vunpack.c.h.b16 %v124
      %v196 = vunpack.c.l.b16 %v125
      %v197 = vunpack.c.h.b16 %v125
      %v198 = vpack.c.b16 %v168, %v166
      %v199 = vpack.c.b16 %v169, %v167
      %v200 = vpack.c.b16 %v172, %v170
      %v201 = vpack.c.b16 %v173, %v171
      %v202 = vpack.c.b16 %v176, %v174
      %v203 = vpack.c.b16 %v177, %v175
      %v204 = vpack.c.b16 %v180, %v178
      %v205 = vpack.c.b16 %v181, %v179
      %v206 = vpack.c.b16 %v184, %v182
      %v207 = vpack.c.b16 %v185, %v183
      %v208 = vpack.c.b16 %v188, %v186
      %v209 = vpack.c.b16 %v189, %v187
      %v210 = vpack.c.b16 %v192, %v190
      %v211 = vpack.c.b16 %v193, %v191
      %v212 = vpack.c.b16 %v196, %v194
      %v213 = vpack.c.b16 %v197, %v195
      %230 = vmatpush.bf16.msra.mxu0 %v212
      %231 = vmatpush.bf16.msra.mxu0 %v210
      %232 = vmatpush.bf16.msra.mxu0 %v208
      %233 = vmatpush.bf16.msra.mxu0 %v206
      %234 = vmatpush.bf16.msra.mxu0 %v204
      %235 = vmatpush.bf16.msra.mxu0 %v202
      %236 = vmatpush.bf16.msra.mxu0 %v200
      %237 = vmatpush.bf16.msra.mxu0 %v198
      %238 = vmatmul.bf16.gmra.mxu0 %v142
      %v239 = vpop.f32.mrf.mxu0
      %v240 = vadd.f32 %v126, %v239
      %v241 = vpop.f32.mrf.mxu0
      %v242 = vadd.f32 %v126, %v241
      %243 = vmatmul.bf16.gmra.mxu0 %v143
      %v244 = vpop.f32.mrf.mxu0
      %v245 = vadd.f32 %v126, %v244
      %v246 = vpop.f32.mrf.mxu0
      %v247 = vadd.f32 %v126, %v246
      %248 = vmatmul.bf16.gmra.mxu0 %v144
      %v249 = vpop.f32.mrf.mxu0
      %v250 = vadd.f32 %v126, %v249
      %v251 = vpop.f32.mrf.mxu0
      %v252 = vadd.f32 %v126, %v251
      %253 = vmatmul.bf16.gmra.mxu0 %v145
      %v254 = vpop.f32.mrf.mxu0
      %v255 = vadd.f32 %v126, %v254
      %v256 = vpop.f32.mrf.mxu0
      %257 = vdwg.mxu0
      %258 = vmatpush.bf16.msra.mxu0 %v213
      %259 = vmatpush.bf16.msra.mxu0 %v211
      %260 = vmatpush.bf16.msra.mxu0 %v209
      %261 = vmatpush.bf16.msra.mxu0 %v207
      %262 = vmatpush.bf16.msra.mxu0 %v205
      %263 = vmatpush.bf16.msra.mxu0 %v203
      %264 = vmatpush.bf16.msra.mxu0 %v201
      %265 = vmatpush.bf16.msra.mxu0 %v199
      %266 = vmatmul.bf16.gmra.mxu0 %v142
      %v267 = vpop.f32.mrf.mxu0
      %v268 = vadd.f32 %v127, %v267
      %v269 = vpop.f32.mrf.mxu0
      %v270 = vadd.f32 %v127, %v269
      %271 = vmatmul.bf16.gmra.mxu0 %v143
      %v272 = vpop.f32.mrf.mxu0
      %v273 = vadd.f32 %v127, %v272
      %v274 = vpop.f32.mrf.mxu0
      %v275 = vadd.f32 %v127, %v274
      %276 = vmatmul.bf16.gmra.mxu0 %v144
      %v277 = vpop.f32.mrf.mxu0
      %v278 = vadd.f32 %v127, %v277
      %v279 = vpop.f32.mrf.mxu0
      %v280 = vadd.f32 %v127, %v279
      %281 = vmatmul.bf16.gmra.mxu0 %v145
      %v282 = vpop.f32.mrf.mxu0
      %v283 = vadd.f32 %v127, %v282
      %v284 = vpop.f32.mrf.mxu0
      %285 = vdwg.mxu0
      %v286 = vadd.f32 %v240, %v268
      %287 = vadd.xlane.f32.xlu0 %v286
      %v288 = vpop.xlane.xlu0 %287
      %v289 = vadd.f32 %v242, %v270
      %290 = vadd.xlane.f32.xlu0 %v289
      %v291 = vpop.xlane.xlu0 %290
      %v292 = vadd.f32 %v245, %v273
      %293 = vadd.xlane.f32.xlu0 %v292
      %v294 = vpop.xlane.xlu0 %293
      %v295 = vadd.f32 %v247, %v275
      %296 = vadd.xlane.f32.xlu0 %v295
      %v297 = vpop.xlane.xlu0 %296
      %v298 = vadd.f32 %v250, %v278
      %299 = vadd.xlane.f32.xlu0 %v298
      %v300 = vpop.xlane.xlu0 %299
      %v301 = vadd.f32 %v252, %v280
      %302 = vadd.xlane.f32.xlu0 %v301
      %v303 = vpop.xlane.xlu0 %302
      %v304 = vadd.f32 %v255, %v283
      %305 = vadd.xlane.f32.xlu0 %v304
      %v306 = vpop.xlane.xlu0 %305
      %v307 = vmul.f32 %v240, %v240
      %v308 = vmul.f32 %v268, %v268
      %v309 = vmul.f32 %v242, %v242
      %v310 = vmul.f32 %v270, %v270
      %v311 = vmul.f32 %v245, %v245
      %v312 = vmul.f32 %v273, %v273
      %v313 = vmul.f32 %v247, %v247
      %v314 = vmul.f32 %v275, %v275
      %v315 = vmul.f32 %v250, %v250
      %v316 = vmul.f32 %v278, %v278
      %v317 = vmul.f32 %v252, %v252
      %v318 = vmul.f32 %v280, %v280
      %v319 = vmul.f32 %v255, %v255
      %v320 = vmul.f32 %v283, %v283
      %v321 = vadd.f32 %v307, %v308
      %322 = vadd.xlane.f32.xlu0 %v321
      %v323 = vpop.xlane.xlu0 %322
      %v324 = vadd.f32 %v309, %v310
      %325 = vadd.xlane.f32.xlu0 %v324
      %v326 = vpop.xlane.xlu0 %325
      %v327 = vadd.f32 %v311, %v312
      %328 = vadd.xlane.f32.xlu0 %v327
      %v329 = vpop.xlane.xlu0 %328
      %v330 = vadd.f32 %v313, %v314
      %331 = vadd.xlane.f32.xlu0 %v330
      %v332 = vpop.xlane.xlu0 %331
      %v333 = vadd.f32 %v315, %v316
      %334 = vadd.xlane.f32.xlu0 %v333
      %v335 = vpop.xlane.xlu0 %334
      %v336 = vadd.f32 %v317, %v318
      %337 = vadd.xlane.f32.xlu0 %v336
      %v338 = vpop.xlane.xlu0 %337
      %v339 = vadd.f32 %v319, %v320
      %340 = vadd.xlane.f32.xlu0 %v339
      %v341 = vpop.xlane.xlu0 %340
      %v342 = vmul.f32 %v288, 0.00390625
      %v343 = vmul.f32 %v291, 0.00390625
      %v344 = vmul.f32 %v294, 0.00390625
      %v345 = vmul.f32 %v297, 0.00390625
      %v346 = vmul.f32 %v300, 0.00390625
      %v347 = vmul.f32 %v303, 0.00390625
      %v348 = vmul.f32 %v306, 0.00390625
      %v349 = vmul.f32 %v323, 0.00390625
      %v350 = vmul.f32 %v326, 0.00390625
      %v351 = vmul.f32 %v329, 0.00390625
      %v352 = vmul.f32 %v332, 0.00390625
      %v353 = vmul.f32 %v335, 0.00390625
      %v354 = vmul.f32 %v338, 0.00390625
      %v355 = vmul.f32 %v341, 0.00390625
      %v356 = vmul.f32 %v342, %v342
      %v357 = vmul.f32 %v343, %v343
      %v358 = vmul.f32 %v344, %v344
      %v359 = vmul.f32 %v345, %v345
      %v360 = vmul.f32 %v346, %v346
      %v361 = vmul.f32 %v347, %v347
      %v362 = vmul.f32 %v348, %v348
      %v363 = vsub.f32 %v349, %v356
      %v364 = vsub.f32 %v350, %v357
      %v365 = vsub.f32 %v351, %v358
      %v366 = vsub.f32 %v352, %v359
      %v367 = vsub.f32 %v353, %v360
      %v368 = vsub.f32 %v354, %v361
      %v369 = vsub.f32 %v355, %v362
      %v370 = vmax.f32 %v363, 0.0
      %v371 = vmax.f32 %v364, 0.0
      %v372 = vmax.f32 %v365, 0.0
      %v373 = vmax.f32 %v366, 0.0
      %v374 = vmax.f32 %v367, 0.0
      %v375 = vmax.f32 %v368, 0.0
      %v376 = vmax.f32 %v369, 0.0
      %v377 = vsub.f32 %v240, %v342
      %v378 = vsub.f32 %v268, %v342
      %v379 = vsub.f32 %v242, %v343
      %v380 = vsub.f32 %v270, %v343
      %v381 = vsub.f32 %v245, %v344
      %v382 = vsub.f32 %v273, %v344
      %v383 = vsub.f32 %v247, %v345
      %v384 = vsub.f32 %v275, %v345
      %v385 = vsub.f32 %v250, %v346
      %v386 = vsub.f32 %v278, %v346
      %v387 = vsub.f32 %v252, %v347
      %v388 = vsub.f32 %v280, %v347
      %v389 = vsub.f32 %v255, %v348
      %v390 = vsub.f32 %v283, %v348
      %v391 = vadd.f32 %v370, 1e-05
      %v392 = vadd.f32 %v371, 1e-05
      %v393 = vadd.f32 %v372, 1e-05
      %v394 = vadd.f32 %v373, 1e-05
      %v395 = vadd.f32 %v374, 1e-05
      %v396 = vadd.f32 %v375, 1e-05
      %v397 = vadd.f32 %v376, 1e-05
      %v398 = vrsqrt.pop %v391
      %v399 = vmul.f32 %v398, %v391
      %v400 = vmul.f32 %v399, %v398
      %v401 = vmul.f32 0.5, %v400
      %v402 = vsub.f32 1.5, %v401
      %v403 = vmul.f32 %v398, %v402
      %vm404 = vweird.f32 %v391
      %vm405 = vweird.f32 %v398
      %vm406 = vmor %vm404, %vm405
      %v407 = vsel %vm406, %v398, %v403
      %v408 = vrsqrt.pop %v392
      %v409 = vmul.f32 %v408, %v392
      %v410 = vmul.f32 %v409, %v408
      %v411 = vmul.f32 0.5, %v410
      %v412 = vsub.f32 1.5, %v411
      %v413 = vmul.f32 %v408, %v412
      %vm414 = vweird.f32 %v392
      %vm415 = vweird.f32 %v408
      %vm416 = vmor %vm414, %vm415
      %v417 = vsel %vm416, %v408, %v413
      %v418 = vrsqrt.pop %v393
      %v419 = vmul.f32 %v418, %v393
      %v420 = vmul.f32 %v419, %v418
      %v421 = vmul.f32 0.5, %v420
      %v422 = vsub.f32 1.5, %v421
      %v423 = vmul.f32 %v418, %v422
      %vm424 = vweird.f32 %v393
      %vm425 = vweird.f32 %v418
      %vm426 = vmor %vm424, %vm425
      %v427 = vsel %vm426, %v418, %v423
      %v428 = vrsqrt.pop %v394
      %v429 = vmul.f32 %v428, %v394
      %v430 = vmul.f32 %v429, %v428
      %v431 = vmul.f32 0.5, %v430
      %v432 = vsub.f32 1.5, %v431
      %v433 = vmul.f32 %v428, %v432
      %vm434 = vweird.f32 %v394
      %vm435 = vweird.f32 %v428
      %vm436 = vmor %vm434, %vm435
      %v437 = vsel %vm436, %v428, %v433
      %v438 = vrsqrt.pop %v395
      %v439 = vmul.f32 %v438, %v395
      %v440 = vmul.f32 %v439, %v438
      %v441 = vmul.f32 0.5, %v440
      %v442 = vsub.f32 1.5, %v441
      %v443 = vmul.f32 %v438, %v442
      %vm444 = vweird.f32 %v395
      %vm445 = vweird.f32 %v438
      %vm446 = vmor %vm444, %vm445
      %v447 = vsel %vm446, %v438, %v443
      %v448 = vrsqrt.pop %v396
      %v449 = vmul.f32 %v448, %v396
      %v450 = vmul.f32 %v449, %v448
      %v451 = vmul.f32 0.5, %v450
      %v452 = vsub.f32 1.5, %v451
      %v453 = vmul.f32 %v448, %v452
      %vm454 = vweird.f32 %v396
      %vm455 = vweird.f32 %v448
      %vm456 = vmor %vm454, %vm455
      %v457 = vsel %vm456, %v448, %v453
      %v458 = vrsqrt.pop %v397
      %v459 = vmul.f32 %v458, %v397
      %v460 = vmul.f32 %v459, %v458
      %v461 = vmul.f32 0.5, %v460
      %v462 = vsub.f32 1.5, %v461
      %v463 = vmul.f32 %v458, %v462
      %vm464 = vweird.f32 %v397
      %vm465 = vweird.f32 %v458
      %vm466 = vmor %vm464, %vm465
      %v467 = vsel %vm466, %v458, %v463
      %v468 = vmul.f32 %v377, %v407
      %v469 = vmul.f32 %v378, %v407
      %v470 = vmul.f32 %v379, %v417
      %v471 = vmul.f32 %v380, %v417
      %v472 = vmul.f32 %v381, %v427
      %v473 = vmul.f32 %v382, %v427
      %v474 = vmul.f32 %v383, %v437
      %v475 = vmul.f32 %v384, %v437
      %v476 = vmul.f32 %v385, %v447
      %v477 = vmul.f32 %v386, %v447
      %v478 = vmul.f32 %v387, %v457
      %v479 = vmul.f32 %v388, %v457
      %v480 = vmul.f32 %v389, %v467
      %v481 = vmul.f32 %v390, %v467
      %v482 = vperm.slane %v101, 1
      %v483 = vperm.slane %v102, 1
      %v484 = vmul.f32 %v468, %v482
      %v485 = vmul.f32 %v469, %v483
      %v486 = vmul.f32 %v470, %v482
      %v487 = vmul.f32 %v471, %v483
      %v488 = vmul.f32 %v472, %v482
      %v489 = vmul.f32 %v473, %v483
      %v490 = vmul.f32 %v474, %v482
      %v491 = vmul.f32 %v475, %v483
      %v492 = vmul.f32 %v476, %v482
      %v493 = vmul.f32 %v477, %v483
      %v494 = vmul.f32 %v478, %v482
      %v495 = vmul.f32 %v479, %v483
      %v496 = vmul.f32 %v480, %v482
      %v497 = vmul.f32 %v481, %v483
      %v498 = vperm.slane %v101, 2
      %v499 = vperm.slane %v102, 2
      %v500 = vadd.f32 %v484, %v498
      %v501 = vadd.f32 %v485, %v499
      %v502 = vadd.f32 %v486, %v498
      %v503 = vadd.f32 %v487, %v499
      %v504 = vadd.f32 %v488, %v498
      %v505 = vadd.f32 %v489, %v499
      %v506 = vadd.f32 %v490, %v498
      %v507 = vadd.f32 %v491, %v499
      %v508 = vadd.f32 %v492, %v498
      %v509 = vadd.f32 %v493, %v499
      %v510 = vadd.f32 %v494, %v498
      %v511 = vadd.f32 %v495, %v499
      %v512 = vadd.f32 %v496, %v498
      %v513 = vadd.f32 %v497, %v499
      %v514 = vmax.f32 %v500, 0.0
      %v515 = vmax.f32 %v501, 0.0
      %v516 = vmax.f32 %v502, 0.0
      %v517 = vmax.f32 %v503, 0.0
      %v518 = vmax.f32 %v504, 0.0
      %v519 = vmax.f32 %v505, 0.0
      %v520 = vmax.f32 %v506, 0.0
      %v521 = vmax.f32 %v507, 0.0
      %v522 = vmax.f32 %v508, 0.0
      %v523 = vmax.f32 %v509, 0.0
      %v524 = vmax.f32 %v510, 0.0
      %v525 = vmax.f32 %v511, 0.0
      %v526 = vmax.f32 %v512, 0.0
      %v527 = vmax.f32 %v513, 0.0
      %v528 = vpack.c.bf16 %v516, %v514
      %v529 = vpack.c.bf16 %v517, %v515
      %v530 = vpack.c.bf16 %v520, %v518
      %v531 = vpack.c.bf16 %v521, %v519
      %v532 = vpack.c.bf16 %v524, %v522
      %v533 = vpack.c.bf16 %v525, %v523
      %v534 = vpack.c.bf16 %v526, %v526
      %v535 = vpack.c.bf16 %v527, %v527
      %v536 = vld [vmem:[#allocation10] sm:$0xff]
      %v537 = vld [vmem:[#allocation10 + $0x8] sm:$0xff]
      %v538 = vld [vmem:[#allocation10 + $0x10] sm:$0xff]
      %v539 = vld [vmem:[#allocation10 + $0x18] sm:$0xff]
      %v540 = vld [vmem:[#allocation10 + $0x20] sm:$0xff]
      %v541 = vld [vmem:[#allocation10 + $0x28] sm:$0xff]
      %v542 = vld [vmem:[#allocation10 + $0x30] sm:$0xff]
      %v543 = vld [vmem:[#allocation10 + $0x38] sm:$0xff]
      %v544 = vld [vmem:[#allocation10 + $0x40] sm:$0xff]
      %v545 = vld [vmem:[#allocation10 + $0x48] sm:$0xff]
      %v546 = vld [vmem:[#allocation10 + $0x50] sm:$0xff]
      %v547 = vld [vmem:[#allocation10 + $0x58] sm:$0xff]
      %v548 = vld [vmem:[#allocation10 + $0x60] sm:$0xff]
      %v549 = vld [vmem:[#allocation10 + $0x68] sm:$0xff]
      %v550 = vld [vmem:[#allocation10 + $0x70] sm:$0xff]
      %v551 = vld [vmem:[#allocation10 + $0x78] sm:$0xff]
      %v552 = vld [vmem:[#allocation10 + $0x80] sm:$0xff]
      %v553 = vld [vmem:[#allocation10 + $0x88] sm:$0xff]
      %v554 = vld [vmem:[#allocation10 + $0x90] sm:$0xff]
      %v555 = vld [vmem:[#allocation10 + $0x98] sm:$0xff]
      %v556 = vld [vmem:[#allocation10 + $0xa0] sm:$0xff]
      %v557 = vld [vmem:[#allocation10 + $0xa8] sm:$0xff]
      %v558 = vld [vmem:[#allocation10 + $0xb0] sm:$0xff]
      %v559 = vld [vmem:[#allocation10 + $0xb8] sm:$0xff]
      %v560 = vld [vmem:[#allocation10 + $0xc0] sm:$0xff]
      %v561 = vld [vmem:[#allocation10 + $0xc8] sm:$0xff]
      %v562 = vld [vmem:[#allocation10 + $0xd0] sm:$0xff]
      %v563 = vld [vmem:[#allocation10 + $0xd8] sm:$0xff]
      %v564 = vld [vmem:[#allocation10 + $0xe0] sm:$0xff]
      %v565 = vld [vmem:[#allocation10 + $0xe8] sm:$0xff]
      %v566 = vld [vmem:[#allocation10 + $0xf0] sm:$0xff]
      %v567 = vld [vmem:[#allocation10 + $0xf8] sm:$0xff]
      %v568 = vperm.slane %v101, 3
      %v569 = vperm.slane %v102, 3
      %v602 = vunpack.c.l.b16 %v536
      %v603 = vunpack.c.h.b16 %v536
      %v604 = vunpack.c.l.b16 %v537
      %v605 = vunpack.c.h.b16 %v537
      %v606 = vunpack.c.l.b16 %v538
      %v607 = vunpack.c.h.b16 %v538
      %v608 = vunpack.c.l.b16 %v539
      %v609 = vunpack.c.h.b16 %v539
      %v610 = vunpack.c.l.b16 %v540
      %v611 = vunpack.c.h.b16 %v540
      %v612 = vunpack.c.l.b16 %v541
      %v613 = vunpack.c.h.b16 %v541
      %v614 = vunpack.c.l.b16 %v542
      %v615 = vunpack.c.h.b16 %v542
      %v616 = vunpack.c.l.b16 %v543
      %v617 = vunpack.c.h.b16 %v543
      %v618 = vunpack.c.l.b16 %v544
      %v619 = vunpack.c.h.b16 %v544
      %v620 = vunpack.c.l.b16 %v545
      %v621 = vunpack.c.h.b16 %v545
      %v622 = vunpack.c.l.b16 %v546
      %v623 = vunpack.c.h.b16 %v546
      %v624 = vunpack.c.l.b16 %v547
      %v625 = vunpack.c.h.b16 %v547
      %v626 = vunpack.c.l.b16 %v548
      %v627 = vunpack.c.h.b16 %v548
      %v628 = vunpack.c.l.b16 %v549
      %v629 = vunpack.c.h.b16 %v549
      %v630 = vunpack.c.l.b16 %v550
      %v631 = vunpack.c.h.b16 %v550
      %v632 = vunpack.c.l.b16 %v551
      %v633 = vunpack.c.h.b16 %v551
      %v634 = vunpack.c.l.b16 %v552
      %v635 = vunpack.c.h.b16 %v552
      %v636 = vunpack.c.l.b16 %v553
      %v637 = vunpack.c.h.b16 %v553
      %v638 = vunpack.c.l.b16 %v554
      %v639 = vunpack.c.h.b16 %v554
      %v640 = vunpack.c.l.b16 %v555
      %v641 = vunpack.c.h.b16 %v555
      %v642 = vunpack.c.l.b16 %v556
      %v643 = vunpack.c.h.b16 %v556
      %v644 = vunpack.c.l.b16 %v557
      %v645 = vunpack.c.h.b16 %v557
      %v646 = vunpack.c.l.b16 %v558
      %v647 = vunpack.c.h.b16 %v558
      %v648 = vunpack.c.l.b16 %v559
      %v649 = vunpack.c.h.b16 %v559
      %v650 = vunpack.c.l.b16 %v560
      %v651 = vunpack.c.h.b16 %v560
      %v652 = vunpack.c.l.b16 %v561
      %v653 = vunpack.c.h.b16 %v561
      %v654 = vunpack.c.l.b16 %v562
      %v655 = vunpack.c.h.b16 %v562
      %v656 = vunpack.c.l.b16 %v563
      %v657 = vunpack.c.h.b16 %v563
      %v658 = vunpack.c.l.b16 %v564
      %v659 = vunpack.c.h.b16 %v564
      %v660 = vunpack.c.l.b16 %v565
      %v661 = vunpack.c.h.b16 %v565
      %v662 = vunpack.c.l.b16 %v566
      %v663 = vunpack.c.h.b16 %v566
      %v664 = vunpack.c.l.b16 %v567
      %v665 = vunpack.c.h.b16 %v567
      %v666 = vpack.c.b16 %v604, %v602
      %v667 = vpack.c.b16 %v605, %v603
      %v668 = vpack.c.b16 %v608, %v606
      %v669 = vpack.c.b16 %v609, %v607
      %v670 = vpack.c.b16 %v612, %v610
      %v671 = vpack.c.b16 %v613, %v611
      %v672 = vpack.c.b16 %v616, %v614
      %v673 = vpack.c.b16 %v617, %v615
      %v674 = vpack.c.b16 %v620, %v618
      %v675 = vpack.c.b16 %v621, %v619
      %v676 = vpack.c.b16 %v624, %v622
      %v677 = vpack.c.b16 %v625, %v623
      %v678 = vpack.c.b16 %v628, %v626
      %v679 = vpack.c.b16 %v629, %v627
      %v680 = vpack.c.b16 %v632, %v630
      %v681 = vpack.c.b16 %v633, %v631
      %v682 = vpack.c.b16 %v636, %v634
      %v683 = vpack.c.b16 %v637, %v635
      %v684 = vpack.c.b16 %v640, %v638
      %v685 = vpack.c.b16 %v641, %v639
      %v686 = vpack.c.b16 %v644, %v642
      %v687 = vpack.c.b16 %v645, %v643
      %v688 = vpack.c.b16 %v648, %v646
      %v689 = vpack.c.b16 %v649, %v647
      %v690 = vpack.c.b16 %v652, %v650
      %v691 = vpack.c.b16 %v653, %v651
      %v692 = vpack.c.b16 %v656, %v654
      %v693 = vpack.c.b16 %v657, %v655
      %v694 = vpack.c.b16 %v660, %v658
      %v695 = vpack.c.b16 %v661, %v659
      %v696 = vpack.c.b16 %v664, %v662
      %v697 = vpack.c.b16 %v665, %v663
      %730 = vmatpush.bf16.msra.mxu0 %v680
      %731 = vmatpush.bf16.msra.mxu0 %v678
      %732 = vmatpush.bf16.msra.mxu0 %v676
      %733 = vmatpush.bf16.msra.mxu0 %v674
      %734 = vmatpush.bf16.msra.mxu0 %v672
      %735 = vmatpush.bf16.msra.mxu0 %v670
      %736 = vmatpush.bf16.msra.mxu0 %v668
      %737 = vmatpush.bf16.msra.mxu0 %v666
      %738 = vmatmul.bf16.gmra.mxu0 %v528
      %v739 = vpop.f32.mrf.mxu0
      %v740 = vadd.f32 %v568, %v739
      %v741 = vpop.f32.mrf.mxu0
      %v742 = vadd.f32 %v568, %v741
      %743 = vmatmul.bf16.gmra.mxu0 %v530
      %v744 = vpop.f32.mrf.mxu0
      %v745 = vadd.f32 %v568, %v744
      %v746 = vpop.f32.mrf.mxu0
      %v747 = vadd.f32 %v568, %v746
      %748 = vmatmul.bf16.gmra.mxu0 %v532
      %v749 = vpop.f32.mrf.mxu0
      %v750 = vadd.f32 %v568, %v749
      %v751 = vpop.f32.mrf.mxu0
      %v752 = vadd.f32 %v568, %v751
      %753 = vmatmul.bf16.gmra.mxu0 %v534
      %v754 = vpop.f32.mrf.mxu0
      %v755 = vadd.f32 %v568, %v754
      %v756 = vpop.f32.mrf.mxu0
      %757 = vdwg.mxu0
      %758 = vmatpush.bf16.msra.mxu0 %v696
      %759 = vmatpush.bf16.msra.mxu0 %v694
      %760 = vmatpush.bf16.msra.mxu0 %v692
      %761 = vmatpush.bf16.msra.mxu0 %v690
      %762 = vmatpush.bf16.msra.mxu0 %v688
      %763 = vmatpush.bf16.msra.mxu0 %v686
      %764 = vmatpush.bf16.msra.mxu0 %v684
      %765 = vmatpush.bf16.msra.mxu0 %v682
      %766 = vmatmul.bf16.gmra.mxu0 %v529
      %v767 = vpop.f32.mrf.mxu0
      %v768 = vadd.f32 %v740, %v767
      %v769 = vpop.f32.mrf.mxu0
      %v770 = vadd.f32 %v742, %v769
      %771 = vmatmul.bf16.gmra.mxu0 %v531
      %v772 = vpop.f32.mrf.mxu0
      %v773 = vadd.f32 %v745, %v772
      %v774 = vpop.f32.mrf.mxu0
      %v775 = vadd.f32 %v747, %v774
      %776 = vmatmul.bf16.gmra.mxu0 %v533
      %v777 = vpop.f32.mrf.mxu0
      %v778 = vadd.f32 %v750, %v777
      %v779 = vpop.f32.mrf.mxu0
      %v780 = vadd.f32 %v752, %v779
      %781 = vmatmul.bf16.gmra.mxu0 %v535
      %v782 = vpop.f32.mrf.mxu0
      %v783 = vadd.f32 %v755, %v782
      %v784 = vpop.f32.mrf.mxu0
      %785 = vdwg.mxu0
      %786 = vmatpush.bf16.msra.mxu0 %v681
      %787 = vmatpush.bf16.msra.mxu0 %v679
      %788 = vmatpush.bf16.msra.mxu0 %v677
      %789 = vmatpush.bf16.msra.mxu0 %v675
      %790 = vmatpush.bf16.msra.mxu0 %v673
      %791 = vmatpush.bf16.msra.mxu0 %v671
      %792 = vmatpush.bf16.msra.mxu0 %v669
      %793 = vmatpush.bf16.msra.mxu0 %v667
      %794 = vmatmul.bf16.gmra.mxu0 %v528
      %v795 = vpop.f32.mrf.mxu0
      %v796 = vadd.f32 %v569, %v795
      %v797 = vpop.f32.mrf.mxu0
      %v798 = vadd.f32 %v569, %v797
      %799 = vmatmul.bf16.gmra.mxu0 %v530
      %v800 = vpop.f32.mrf.mxu0
      %v801 = vadd.f32 %v569, %v800
      %v802 = vpop.f32.mrf.mxu0
      %v803 = vadd.f32 %v569, %v802
      %804 = vmatmul.bf16.gmra.mxu0 %v532
      %v805 = vpop.f32.mrf.mxu0
      %v806 = vadd.f32 %v569, %v805
      %v807 = vpop.f32.mrf.mxu0
      %v808 = vadd.f32 %v569, %v807
      %809 = vmatmul.bf16.gmra.mxu0 %v534
      %v810 = vpop.f32.mrf.mxu0
      %v811 = vadd.f32 %v569, %v810
      %v812 = vpop.f32.mrf.mxu0
      %813 = vdwg.mxu0
      %814 = vmatpush.bf16.msra.mxu0 %v697
      %815 = vmatpush.bf16.msra.mxu0 %v695
      %816 = vmatpush.bf16.msra.mxu0 %v693
      %817 = vmatpush.bf16.msra.mxu0 %v691
      %818 = vmatpush.bf16.msra.mxu0 %v689
      %819 = vmatpush.bf16.msra.mxu0 %v687
      %820 = vmatpush.bf16.msra.mxu0 %v685
      %821 = vmatpush.bf16.msra.mxu0 %v683
      %822 = vmatmul.bf16.gmra.mxu0 %v529
      %v823 = vpop.f32.mrf.mxu0
      %v824 = vadd.f32 %v796, %v823
      %v825 = vpop.f32.mrf.mxu0
      %v826 = vadd.f32 %v798, %v825
      %827 = vmatmul.bf16.gmra.mxu0 %v531
      %v828 = vpop.f32.mrf.mxu0
      %v829 = vadd.f32 %v801, %v828
      %v830 = vpop.f32.mrf.mxu0
      %v831 = vadd.f32 %v803, %v830
      %832 = vmatmul.bf16.gmra.mxu0 %v533
      %v833 = vpop.f32.mrf.mxu0
      %v834 = vadd.f32 %v806, %v833
      %v835 = vpop.f32.mrf.mxu0
      %v836 = vadd.f32 %v808, %v835
      %837 = vmatmul.bf16.gmra.mxu0 %v535
      %v838 = vpop.f32.mrf.mxu0
      %v839 = vadd.f32 %v811, %v838
      %v840 = vpop.f32.mrf.mxu0
      %841 = vdwg.mxu0
      %v842 = vadd.f32 %v768, %v824
      %843 = vadd.xlane.f32.xlu0 %v842
      %v844 = vpop.xlane.xlu0 %843
      %v845 = vadd.f32 %v770, %v826
      %846 = vadd.xlane.f32.xlu0 %v845
      %v847 = vpop.xlane.xlu0 %846
      %v848 = vadd.f32 %v773, %v829
      %849 = vadd.xlane.f32.xlu0 %v848
      %v850 = vpop.xlane.xlu0 %849
      %v851 = vadd.f32 %v775, %v831
      %852 = vadd.xlane.f32.xlu0 %v851
      %v853 = vpop.xlane.xlu0 %852
      %v854 = vadd.f32 %v778, %v834
      %855 = vadd.xlane.f32.xlu0 %v854
      %v856 = vpop.xlane.xlu0 %855
      %v857 = vadd.f32 %v780, %v836
      %858 = vadd.xlane.f32.xlu0 %v857
      %v859 = vpop.xlane.xlu0 %858
      %v860 = vadd.f32 %v783, %v839
      %861 = vadd.xlane.f32.xlu0 %v860
      %v862 = vpop.xlane.xlu0 %861
      %v863 = vmul.f32 %v768, %v768
      %v864 = vmul.f32 %v824, %v824
      %v865 = vmul.f32 %v770, %v770
      %v866 = vmul.f32 %v826, %v826
      %v867 = vmul.f32 %v773, %v773
      %v868 = vmul.f32 %v829, %v829
      %v869 = vmul.f32 %v775, %v775
      %v870 = vmul.f32 %v831, %v831
      %v871 = vmul.f32 %v778, %v778
      %v872 = vmul.f32 %v834, %v834
      %v873 = vmul.f32 %v780, %v780
      %v874 = vmul.f32 %v836, %v836
      %v875 = vmul.f32 %v783, %v783
      %v876 = vmul.f32 %v839, %v839
      %v877 = vadd.f32 %v863, %v864
      %878 = vadd.xlane.f32.xlu0 %v877
      %v879 = vpop.xlane.xlu0 %878
      %v880 = vadd.f32 %v865, %v866
      %881 = vadd.xlane.f32.xlu0 %v880
      %v882 = vpop.xlane.xlu0 %881
      %v883 = vadd.f32 %v867, %v868
      %884 = vadd.xlane.f32.xlu0 %v883
      %v885 = vpop.xlane.xlu0 %884
      %v886 = vadd.f32 %v869, %v870
      %887 = vadd.xlane.f32.xlu0 %v886
      %v888 = vpop.xlane.xlu0 %887
      %v889 = vadd.f32 %v871, %v872
      %890 = vadd.xlane.f32.xlu0 %v889
      %v891 = vpop.xlane.xlu0 %890
      %v892 = vadd.f32 %v873, %v874
      %893 = vadd.xlane.f32.xlu0 %v892
      %v894 = vpop.xlane.xlu0 %893
      %v895 = vadd.f32 %v875, %v876
      %896 = vadd.xlane.f32.xlu0 %v895
      %v897 = vpop.xlane.xlu0 %896
      %v898 = vmul.f32 %v844, 0.00390625
      %v899 = vmul.f32 %v847, 0.00390625
      %v900 = vmul.f32 %v850, 0.00390625
      %v901 = vmul.f32 %v853, 0.00390625
      %v902 = vmul.f32 %v856, 0.00390625
      %v903 = vmul.f32 %v859, 0.00390625
      %v904 = vmul.f32 %v862, 0.00390625
      %v905 = vmul.f32 %v879, 0.00390625
      %v906 = vmul.f32 %v882, 0.00390625
      %v907 = vmul.f32 %v885, 0.00390625
      %v908 = vmul.f32 %v888, 0.00390625
      %v909 = vmul.f32 %v891, 0.00390625
      %v910 = vmul.f32 %v894, 0.00390625
      %v911 = vmul.f32 %v897, 0.00390625
      %v912 = vmul.f32 %v898, %v898
      %v913 = vmul.f32 %v899, %v899
      %v914 = vmul.f32 %v900, %v900
      %v915 = vmul.f32 %v901, %v901
      %v916 = vmul.f32 %v902, %v902
      %v917 = vmul.f32 %v903, %v903
      %v918 = vmul.f32 %v904, %v904
      %v919 = vsub.f32 %v905, %v912
      %v920 = vsub.f32 %v906, %v913
      %v921 = vsub.f32 %v907, %v914
      %v922 = vsub.f32 %v908, %v915
      %v923 = vsub.f32 %v909, %v916
      %v924 = vsub.f32 %v910, %v917
      %v925 = vsub.f32 %v911, %v918
      %v926 = vmax.f32 %v919, 0.0
      %v927 = vmax.f32 %v920, 0.0
      %v928 = vmax.f32 %v921, 0.0
      %v929 = vmax.f32 %v922, 0.0
      %v930 = vmax.f32 %v923, 0.0
      %v931 = vmax.f32 %v924, 0.0
      %v932 = vmax.f32 %v925, 0.0
      %v933 = vsub.f32 %v768, %v898
      %v934 = vsub.f32 %v824, %v898
      %v935 = vsub.f32 %v770, %v899
      %v936 = vsub.f32 %v826, %v899
      %v937 = vsub.f32 %v773, %v900
      %v938 = vsub.f32 %v829, %v900
      %v939 = vsub.f32 %v775, %v901
      %v940 = vsub.f32 %v831, %v901
      %v941 = vsub.f32 %v778, %v902
      %v942 = vsub.f32 %v834, %v902
      %v943 = vsub.f32 %v780, %v903
      %v944 = vsub.f32 %v836, %v903
      %v945 = vsub.f32 %v783, %v904
      %v946 = vsub.f32 %v839, %v904
      %v947 = vadd.f32 %v926, 1e-05
      %v948 = vadd.f32 %v927, 1e-05
      %v949 = vadd.f32 %v928, 1e-05
      %v950 = vadd.f32 %v929, 1e-05
      %v951 = vadd.f32 %v930, 1e-05
      %v952 = vadd.f32 %v931, 1e-05
      %v953 = vadd.f32 %v932, 1e-05
      %v954 = vrsqrt.pop %v947
      %v955 = vmul.f32 %v954, %v947
      %v956 = vmul.f32 %v955, %v954
      %v957 = vmul.f32 0.5, %v956
      %v958 = vsub.f32 1.5, %v957
      %v959 = vmul.f32 %v954, %v958
      %vm960 = vweird.f32 %v947
      %vm961 = vweird.f32 %v954
      %vm962 = vmor %vm960, %vm961
      %v963 = vsel %vm962, %v954, %v959
      %v964 = vrsqrt.pop %v948
      %v965 = vmul.f32 %v964, %v948
      %v966 = vmul.f32 %v965, %v964
      %v967 = vmul.f32 0.5, %v966
      %v968 = vsub.f32 1.5, %v967
      %v969 = vmul.f32 %v964, %v968
      %vm970 = vweird.f32 %v948
      %vm971 = vweird.f32 %v964
      %vm972 = vmor %vm970, %vm971
      %v973 = vsel %vm972, %v964, %v969
      %v974 = vrsqrt.pop %v949
      %v975 = vmul.f32 %v974, %v949
      %v976 = vmul.f32 %v975, %v974
      %v977 = vmul.f32 0.5, %v976
      %v978 = vsub.f32 1.5, %v977
      %v979 = vmul.f32 %v974, %v978
      %vm980 = vweird.f32 %v949
      %vm981 = vweird.f32 %v974
      %vm982 = vmor %vm980, %vm981
      %v983 = vsel %vm982, %v974, %v979
      %v984 = vrsqrt.pop %v950
      %v985 = vmul.f32 %v984, %v950
      %v986 = vmul.f32 %v985, %v984
      %v987 = vmul.f32 0.5, %v986
      %v988 = vsub.f32 1.5, %v987
      %v989 = vmul.f32 %v984, %v988
      %vm990 = vweird.f32 %v950
      %vm991 = vweird.f32 %v984
      %vm992 = vmor %vm990, %vm991
      %v993 = vsel %vm992, %v984, %v989
      %v994 = vrsqrt.pop %v951
      %v995 = vmul.f32 %v994, %v951
      %v996 = vmul.f32 %v995, %v994
      %v997 = vmul.f32 0.5, %v996
      %v998 = vsub.f32 1.5, %v997
      %v999 = vmul.f32 %v994, %v998
      %vm1000 = vweird.f32 %v951
      %vm1001 = vweird.f32 %v994
      %vm1002 = vmor %vm1000, %vm1001
      %v1003 = vsel %vm1002, %v994, %v999
      %v1004 = vrsqrt.pop %v952
      %v1005 = vmul.f32 %v1004, %v952
      %v1006 = vmul.f32 %v1005, %v1004
      %v1007 = vmul.f32 0.5, %v1006
      %v1008 = vsub.f32 1.5, %v1007
      %v1009 = vmul.f32 %v1004, %v1008
      %vm1010 = vweird.f32 %v952
      %vm1011 = vweird.f32 %v1004
      %vm1012 = vmor %vm1010, %vm1011
      %v1013 = vsel %vm1012, %v1004, %v1009
      %v1014 = vrsqrt.pop %v953
      %v1015 = vmul.f32 %v1014, %v953
      %v1016 = vmul.f32 %v1015, %v1014
      %v1017 = vmul.f32 0.5, %v1016
      %v1018 = vsub.f32 1.5, %v1017
      %v1019 = vmul.f32 %v1014, %v1018
      %vm1020 = vweird.f32 %v953
      %vm1021 = vweird.f32 %v1014
      %vm1022 = vmor %vm1020, %vm1021
      %v1023 = vsel %vm1022, %v1014, %v1019
      %v1024 = vmul.f32 %v933, %v963
      %v1025 = vmul.f32 %v934, %v963
      %v1026 = vmul.f32 %v935, %v973
      %v1027 = vmul.f32 %v936, %v973
      %v1028 = vmul.f32 %v937, %v983
      %v1029 = vmul.f32 %v938, %v983
      %v1030 = vmul.f32 %v939, %v993
      %v1031 = vmul.f32 %v940, %v993
      %v1032 = vmul.f32 %v941, %v1003
      %v1033 = vmul.f32 %v942, %v1003
      %v1034 = vmul.f32 %v943, %v1013
      %v1035 = vmul.f32 %v944, %v1013
      %v1036 = vmul.f32 %v945, %v1023
      %v1037 = vmul.f32 %v946, %v1023
      %v1038 = vperm.slane %v101, 4
      %v1039 = vperm.slane %v102, 4
      %v1040 = vmul.f32 %v1024, %v1038
      %v1041 = vmul.f32 %v1025, %v1039
      %v1042 = vmul.f32 %v1026, %v1038
      %v1043 = vmul.f32 %v1027, %v1039
      %v1044 = vmul.f32 %v1028, %v1038
      %v1045 = vmul.f32 %v1029, %v1039
      %v1046 = vmul.f32 %v1030, %v1038
      %v1047 = vmul.f32 %v1031, %v1039
      %v1048 = vmul.f32 %v1032, %v1038
      %v1049 = vmul.f32 %v1033, %v1039
      %v1050 = vmul.f32 %v1034, %v1038
      %v1051 = vmul.f32 %v1035, %v1039
      %v1052 = vmul.f32 %v1036, %v1038
      %v1053 = vmul.f32 %v1037, %v1039
      %v1054 = vperm.slane %v101, 5
      %v1055 = vperm.slane %v102, 5
      %v1056 = vadd.f32 %v1040, %v1054
      %v1057 = vadd.f32 %v1041, %v1055
      %v1058 = vadd.f32 %v1042, %v1054
      %v1059 = vadd.f32 %v1043, %v1055
      %v1060 = vadd.f32 %v1044, %v1054
      %v1061 = vadd.f32 %v1045, %v1055
      %v1062 = vadd.f32 %v1046, %v1054
      %v1063 = vadd.f32 %v1047, %v1055
      %v1064 = vadd.f32 %v1048, %v1054
      %v1065 = vadd.f32 %v1049, %v1055
      %v1066 = vadd.f32 %v1050, %v1054
      %v1067 = vadd.f32 %v1051, %v1055
      %v1068 = vadd.f32 %v1052, %v1054
      %v1069 = vadd.f32 %v1053, %v1055
      %v1070 = vmax.f32 %v1056, 0.0
      %v1071 = vmax.f32 %v1057, 0.0
      %v1072 = vmax.f32 %v1058, 0.0
      %v1073 = vmax.f32 %v1059, 0.0
      %v1074 = vmax.f32 %v1060, 0.0
      %v1075 = vmax.f32 %v1061, 0.0
      %v1076 = vmax.f32 %v1062, 0.0
      %v1077 = vmax.f32 %v1063, 0.0
      %v1078 = vmax.f32 %v1064, 0.0
      %v1079 = vmax.f32 %v1065, 0.0
      %v1080 = vmax.f32 %v1066, 0.0
      %v1081 = vmax.f32 %v1067, 0.0
      %v1082 = vmax.f32 %v1068, 0.0
      %v1083 = vmax.f32 %v1069, 0.0
      %v1084 = vpack.c.bf16 %v1071, %v1070
      %v1085 = vpack.c.bf16 %v1073, %v1072
      %v1086 = vpack.c.bf16 %v1075, %v1074
      %v1087 = vpack.c.bf16 %v1077, %v1076
      %v1088 = vpack.c.bf16 %v1079, %v1078
      %v1089 = vpack.c.bf16 %v1081, %v1080
      %v1090 = vpack.c.bf16 %v1083, %v1082
      %1091 = vst [vmem:[#allocation2] sm:$0xff] %v1084
      %1092 = vst [vmem:[#allocation2 + $0x8] sm:$0xff] %v1085
      %1093 = vst [vmem:[#allocation2 + $0x10] sm:$0xff] %v1086
      %1094 = vst [vmem:[#allocation2 + $0x18] sm:$0xff] %v1087
      %1095 = vst [vmem:[#allocation2 + $0x20] sm:$0xff] %v1088
      %1096 = vst [vmem:[#allocation2 + $0x28] sm:$0xff] %v1089
      %1097 = vst [vmem:[#allocation2 + $0x30] sm:$0xff] %v1090
      %vm1098 = vcmask 7168
      %1099 = vst.msk [vmem:[#allocation3] sm:$0xff] %vm1098, -inf
      %1100 = vst.msk [vmem:[#allocation3 + $0x8] sm:$0xff] %vm1098, -inf
      %1101 = vst.msk [vmem:[#allocation3 + $0x10] sm:$0xff] %vm1098, -inf
      %1102 = vst.msk [vmem:[#allocation3 + $0x18] sm:$0xff] %vm1098, -inf
      %1103 = vst.msk [vmem:[#allocation3 + $0x20] sm:$0xff] %vm1098, -inf
      %1104 = vst.msk [vmem:[#allocation3 + $0x28] sm:$0xff] %vm1098, -inf
      %1105 = vst.msk [vmem:[#allocation3 + $0x30] sm:$0xff] %vm1098, -inf
      %1106 = vst.msk [vmem:[#allocation4] sm:$0xff] %vm1098, 0.0
      %1107 = vst.msk [vmem:[#allocation4 + $0x8] sm:$0xff] %vm1098, 0.0
      %1108 = vst.msk [vmem:[#allocation4 + $0x10] sm:$0xff] %vm1098, 0.0
      %1109 = vst.msk [vmem:[#allocation4 + $0x18] sm:$0xff] %vm1098, 0.0
      %1110 = vst.msk [vmem:[#allocation4 + $0x20] sm:$0xff] %vm1098, 0.0
      %1111 = vst.msk [vmem:[#allocation4 + $0x28] sm:$0xff] %vm1098, 0.0
      %1112 = vst.msk [vmem:[#allocation4 + $0x30] sm:$0xff] %vm1098, 0.0
    $region45: #{tpu_custom_call.1} parent=1 // pred_fallthru
      _
    %s1113 = smul.u32 0, 384
    %s1114 = sshra.s32 %s1113, 7
    %s1115 = sand.u32 %s1113, 127
    %s1116 = smul.addr %s1114, 8
    %s1117 = scalar_lea.vmem [#allocation13], %s1116
    %s1118 = scalar_lea.vmem %s1117, 6 [#allocation13]
    %v1119 = vld [vmem:[%s1118] ss:$8 sm:$0x7]
    %v1120 = vld [vmem:[#allocation2] sm:$0xff]
    %v1121 = vld [vmem:[#allocation2 + $0x8] sm:$0xff]
    %v1122 = vld [vmem:[#allocation2 + $0x10] sm:$0xff]
    %v1123 = vld [vmem:[#allocation2 + $0x18] sm:$0xff]
    %v1124 = vld [vmem:[#allocation2 + $0x20] sm:$0xff]
    %v1125 = vld [vmem:[#allocation2 + $0x28] sm:$0xff]
    %v1126 = vld [vmem:[#allocation2 + $0x30] sm:$0xff]
    %v1127 = vld [vmem:[#allocation11] sm:$0xff]
    %v1128 = vld [vmem:[#allocation11 + $0x8] sm:$0xf]
    %v1129 = vld [vmem:[#allocation11 + $0xc] sm:$0xff]
    %v1130 = vld [vmem:[#allocation11 + $0x14] sm:$0xf]
    %v1131 = vld [vmem:[#allocation11 + $0x18] sm:$0xff]
    %v1132 = vld [vmem:[#allocation11 + $0x20] sm:$0xf]
    %v1133 = vld [vmem:[#allocation11 + $0x24] sm:$0xff]
    %v1134 = vld [vmem:[#allocation11 + $0x2c] sm:$0xf]
    %v1135 = vld [vmem:[#allocation11 + $0x30] sm:$0xff]
    %v1136 = vld [vmem:[#allocation11 + $0x38] sm:$0xf]
    %v1137 = vld [vmem:[#allocation11 + $0x3c] sm:$0xff]
    %v1138 = vld [vmem:[#allocation11 + $0x44] sm:$0xf]
    %v1139 = vld [vmem:[#allocation11 + $0x48] sm:$0xff]
    %v1140 = vld [vmem:[#allocation11 + $0x50] sm:$0xf]
    %v1141 = vld [vmem:[#allocation11 + $0x54] sm:$0xff]
    %v1142 = vld [vmem:[#allocation11 + $0x5c] sm:$0xf]
    %v1143 = vld [vmem:[#allocation11 + $0x60] sm:$0xff]
    %v1144 = vld [vmem:[#allocation11 + $0x68] sm:$0xf]
    %v1145 = vld [vmem:[#allocation11 + $0x6c] sm:$0xff]
    %v1146 = vld [vmem:[#allocation11 + $0x74] sm:$0xf]
    %v1147 = vld [vmem:[#allocation11 + $0x78] sm:$0xff]
    %v1148 = vld [vmem:[#allocation11 + $0x80] sm:$0xf]
    %v1149 = vld [vmem:[#allocation11 + $0x84] sm:$0xff]
    %v1150 = vld [vmem:[#allocation11 + $0x8c] sm:$0xf]
    %v1151 = vld [vmem:[#allocation11 + $0x90] sm:$0xff]
    %v1152 = vld [vmem:[#allocation11 + $0x98] sm:$0xf]
    %v1153 = vld [vmem:[#allocation11 + $0x9c] sm:$0xff]
    %v1154 = vld [vmem:[#allocation11 + $0xa4] sm:$0xf]
    %v1155 = vld [vmem:[#allocation11 + $0xa8] sm:$0xff]
    %v1156 = vld [vmem:[#allocation11 + $0xb0] sm:$0xf]
    %v1157 = vld [vmem:[#allocation11 + $0xb4] sm:$0xff]
    %v1158 = vld [vmem:[#allocation11 + $0xbc] sm:$0xf]
    %v1159 = vld [vmem:[#allocation11 + $0xc0] sm:$0xff]
    %v1160 = vld [vmem:[#allocation11 + $0xc8] sm:$0xf]
    %v1161 = vld [vmem:[#allocation11 + $0xcc] sm:$0xff]
    %v1162 = vld [vmem:[#allocation11 + $0xd4] sm:$0xf]
    %v1163 = vld [vmem:[#allocation11 + $0xd8] sm:$0xff]
    %v1164 = vld [vmem:[#allocation11 + $0xe0] sm:$0xf]
    %v1165 = vld [vmem:[#allocation11 + $0xe4] sm:$0xff]
    %v1166 = vld [vmem:[#allocation11 + $0xec] sm:$0xf]
    %v1167 = vld [vmem:[#allocation11 + $0xf0] sm:$0xff]
    %v1168 = vld [vmem:[#allocation11 + $0xf8] sm:$0xf]
    %v1169 = vld [vmem:[#allocation11 + $0xfc] sm:$0xff]
    %v1170 = vld [vmem:[#allocation11 + $0x104] sm:$0xf]
    %v1171 = vld [vmem:[#allocation11 + $0x108] sm:$0xff]
    %v1172 = vld [vmem:[#allocation11 + $0x110] sm:$0xf]
    %v1173 = vld [vmem:[#allocation11 + $0x114] sm:$0xff]
    %v1174 = vld [vmem:[#allocation11 + $0x11c] sm:$0xf]
    %v1175 = vld [vmem:[#allocation11 + $0x120] sm:$0xff]
    %v1176 = vld [vmem:[#allocation11 + $0x128] sm:$0xf]
    %v1177 = vld [vmem:[#allocation11 + $0x12c] sm:$0xff]
    %v1178 = vld [vmem:[#allocation11 + $0x134] sm:$0xf]
    %v1179 = vld [vmem:[#allocation11 + $0x138] sm:$0xff]
    %v1180 = vld [vmem:[#allocation11 + $0x140] sm:$0xf]
    %v1181 = vld [vmem:[#allocation11 + $0x144] sm:$0xff]
    %v1182 = vld [vmem:[#allocation11 + $0x14c] sm:$0xf]
    %v1183 = vld [vmem:[#allocation11 + $0x150] sm:$0xff]
    %v1184 = vld [vmem:[#allocation11 + $0x158] sm:$0xf]
    %v1185 = vld [vmem:[#allocation11 + $0x15c] sm:$0xff]
    %v1186 = vld [vmem:[#allocation11 + $0x164] sm:$0xf]
    %v1187 = vld [vmem:[#allocation11 + $0x168] sm:$0xff]
    %v1188 = vld [vmem:[#allocation11 + $0x170] sm:$0xf]
    %v1189 = vld [vmem:[#allocation11 + $0x174] sm:$0xff]
    %v1190 = vld [vmem:[#allocation11 + $0x17c] sm:$0xf]
    %v1192 = vperm.slane %v1119, 0
    %v1193 = vperm.slane %v1119, 1
    %v1194 = vperm.slane %v1119, 2
    %v1205 = vunpack.c.l.b16 %v1120
    %v1206 = vunpack.c.h.b16 %v1120
    %v1207 = vunpack.c.l.b16 %v1121
    %v1208 = vunpack.c.h.b16 %v1121
    %v1209 = vunpack.c.l.b16 %v1122
    %v1210 = vunpack.c.h.b16 %v1122
    %v1211 = vunpack.c.l.b16 %v1123
    %v1212 = vunpack.c.h.b16 %v1123
    %v1213 = vunpack.c.l.b16 %v1124
    %v1214 = vunpack.c.h.b16 %v1124
    %v1215 = vunpack.c.l.b16 %v1125
    %v1216 = vunpack.c.h.b16 %v1125
    %v1217 = vunpack.c.l.b16 %v1126
    %v1218 = vunpack.c.h.b16 %v1126
    %v1219 = vpack.c.b16 %v1207, %v1205
    %v1220 = vpack.c.b16 %v1208, %v1206
    %v1221 = vpack.c.b16 %v1211, %v1209
    %v1222 = vpack.c.b16 %v1212, %v1210
    %v1223 = vpack.c.b16 %v1215, %v1213
    %v1224 = vpack.c.b16 %v1216, %v1214
    %v1225 = vpack.c.b16 %v1217, %v1217
    %v1226 = vpack.c.b16 %v1218, %v1218
    %v1299 = vunpack.c.l.b16 %v1127
    %v1300 = vunpack.c.h.b16 %v1127
    %v1301 = vunpack.c.l.b16 %v1128
    %v1302 = vunpack.c.l.b16 %v1129
    %v1303 = vunpack.c.h.b16 %v1129
    %v1304 = vunpack.c.l.b16 %v1130
    %v1305 = vunpack.c.l.b16 %v1131
    %v1306 = vunpack.c.h.b16 %v1131
    %v1307 = vunpack.c.l.b16 %v1132
    %v1308 = vunpack.c.l.b16 %v1133
    %v1309 = vunpack.c.h.b16 %v1133
    %v1310 = vunpack.c.l.b16 %v1134
    %v1311 = vunpack.c.l.b16 %v1135
    %v1312 = vunpack.c.h.b16 %v1135
    %v1313 = vunpack.c.l.b16 %v1136
    %v1314 = vunpack.c.l.b16 %v1137
    %v1315 = vunpack.c.h.b16 %v1137
    %v1316 = vunpack.c.l.b16 %v1138
    %v1317 = vunpack.c.l.b16 %v1139
    %v1318 = vunpack.c.h.b16 %v1139
    %v1319 = vunpack.c.l.b16 %v1140
    %v1320 = vunpack.c.l.b16 %v1141
    %v1321 = vunpack.c.h.b16 %v1141
    %v1322 = vunpack.c.l.b16 %v1142
    %v1323 = vunpack.c.l.b16 %v1143
    %v1324 = vunpack.c.h.b16 %v1143
    %v1325 = vunpack.c.l.b16 %v1144
    %v1326 = vunpack.c.l.b16 %v1145
    %v1327 = vunpack.c.h.b16 %v1145
    %v1328 = vunpack.c.l.b16 %v1146
    %v1329 = vunpack.c.l.b16 %v1147
    %v1330 = vunpack.c.h.b16 %v1147
    %v1331 = vunpack.c.l.b16 %v1148
    %v1332 = vunpack.c.l.b16 %v1149
    %v1333 = vunpack.c.h.b16 %v1149
    %v1334 = vunpack.c.l.b16 %v1150
    %v1335 = vunpack.c.l.b16 %v1151
    %v1336 = vunpack.c.h.b16 %v1151
    %v1337 = vunpack.c.l.b16 %v1152
    %v1338 = vunpack.c.l.b16 %v1153
    %v1339 = vunpack.c.h.b16 %v1153
    %v1340 = vunpack.c.l.b16 %v1154
    %v1341 = vunpack.c.l.b16 %v1155
    %v1342 = vunpack.c.h.b16 %v1155
    %v1343 = vunpack.c.l.b16 %v1156
    %v1344 = vunpack.c.l.b16 %v1157
    %v1345 = vunpack.c.h.b16 %v1157
    %v1346 = vunpack.c.l.b16 %v1158
    %v1347 = vunpack.c.l.b16 %v1159
    %v1348 = vunpack.c.h.b16 %v1159
    %v1349 = vunpack.c.l.b16 %v1160
    %v1350 = vunpack.c.l.b16 %v1161
    %v1351 = vunpack.c.h.b16 %v1161
    %v1352 = vunpack.c.l.b16 %v1162
    %v1353 = vunpack.c.l.b16 %v1163
    %v1354 = vunpack.c.h.b16 %v1163
    %v1355 = vunpack.c.l.b16 %v1164
    %v1356 = vunpack.c.l.b16 %v1165
    %v1357 = vunpack.c.h.b16 %v1165
    %v1358 = vunpack.c.l.b16 %v1166
    %v1359 = vunpack.c.l.b16 %v1167
    %v1360 = vunpack.c.h.b16 %v1167
    %v1361 = vunpack.c.l.b16 %v1168
    %v1362 = vunpack.c.l.b16 %v1169
    %v1363 = vunpack.c.h.b16 %v1169
    %v1364 = vunpack.c.l.b16 %v1170
    %v1365 = vunpack.c.l.b16 %v1171
    %v1366 = vunpack.c.h.b16 %v1171
    %v1367 = vunpack.c.l.b16 %v1172
    %v1368 = vunpack.c.l.b16 %v1173
    %v1369 = vunpack.c.h.b16 %v1173
    %v1370 = vunpack.c.l.b16 %v1174
    %v1371 = vunpack.c.l.b16 %v1175
    %v1372 = vunpack.c.h.b16 %v1175
    %v1373 = vunpack.c.l.b16 %v1176
    %v1374 = vunpack.c.l.b16 %v1177
    %v1375 = vunpack.c.h.b16 %v1177
    %v1376 = vunpack.c.l.b16 %v1178
    %v1377 = vunpack.c.l.b16 %v1179
    %v1378 = vunpack.c.h.b16 %v1179
    %v1379 = vunpack.c.l.b16 %v1180
    %v1380 = vunpack.c.l.b16 %v1181
    %v1381 = vunpack.c.h.b16 %v1181
    %v1382 = vunpack.c.l.b16 %v1182
    %v1383 = vunpack.c.l.b16 %v1183
    %v1384 = vunpack.c.h.b16 %v1183
    %v1385 = vunpack.c.l.b16 %v1184
    %v1386 = vunpack.c.l.b16 %v1185
    %v1387 = vunpack.c.h.b16 %v1185
    %v1388 = vunpack.c.l.b16 %v1186
    %v1389 = vunpack.c.l.b16 %v1187
    %v1390 = vunpack.c.h.b16 %v1187
    %v1391 = vunpack.c.l.b16 %v1188
    %v1392 = vunpack.c.l.b16 %v1189
    %v1393 = vunpack.c.h.b16 %v1189
    %v1394 = vunpack.c.l.b16 %v1190
    %v1395 = vpack.c.b16 %v1302, %v1299
    %v1396 = vpack.c.b16 %v1303, %v1300
    %v1397 = vpack.c.b16 %v1304, %v1301
    %v1398 = vpack.c.b16 %v1308, %v1305
    %v1399 = vpack.c.b16 %v1309, %v1306
    %v1400 = vpack.c.b16 %v1310, %v1307
    %v1401 = vpack.c.b16 %v1314, %v1311
    %v1402 = vpack.c.b16 %v1315, %v1312
    %v1403 = vpack.c.b16 %v1316, %v1313
    %v1404 = vpack.c.b16 %v1320, %v1317
    %v1405 = vpack.c.b16 %v1321, %v1318
    %v1406 = vpack.c.b16 %v1322, %v1319
    %v1407 = vpack.c.b16 %v1326, %v1323
    %v1408 = vpack.c.b16 %v1327, %v1324
    %v1409 = vpack.c.b16 %v1328, %v1325
    %v1410 = vpack.c.b16 %v1332, %v1329
    %v1411 = vpack.c.b16 %v1333, %v1330
    %v1412 = vpack.c.b16 %v1334, %v1331
    %v1413 = vpack.c.b16 %v1338, %v1335
    %v1414 = vpack.c.b16 %v1339, %v1336
    %v1415 = vpack.c.b16 %v1340, %v1337
    %v1416 = vpack.c.b16 %v1344, %v1341
    %v1417 = vpack.c.b16 %v1345, %v1342
    %v1418 = vpack.c.b16 %v1346, %v1343
    %v1419 = vpack.c.b16 %v1350, %v1347
    %v1420 = vpack.c.b16 %v1351, %v1348
    %v1421 = vpack.c.b16 %v1352, %v1349
    %v1422 = vpack.c.b16 %v1356, %v1353
    %v1423 = vpack.c.b16 %v1357, %v1354
    %v1424 = vpack.c.b16 %v1358, %v1355
    %v1425 = vpack.c.b16 %v1362, %v1359
    %v1426 = vpack.c.b16 %v1363, %v1360
    %v1427 = vpack.c.b16 %v1364, %v1361
    %v1428 = vpack.c.b16 %v1368, %v1365
    %v1429 = vpack.c.b16 %v1369, %v1366
    %v1430 = vpack.c.b16 %v1370, %v1367
    %v1431 = vpack.c.b16 %v1374, %v1371
    %v1432 = vpack.c.b16 %v1375, %v1372
    %v1433 = vpack.c.b16 %v1376, %v1373
    %v1434 = vpack.c.b16 %v1380, %v1377
    %v1435 = vpack.c.b16 %v1381, %v1378
    %v1436 = vpack.c.b16 %v1382, %v1379
    %v1437 = vpack.c.b16 %v1386, %v1383
    %v1438 = vpack.c.b16 %v1387, %v1384
    %v1439 = vpack.c.b16 %v1388, %v1385
    %v1440 = vpack.c.b16 %v1392, %v1389
    %v1441 = vpack.c.b16 %v1393, %v1390
    %v1442 = vpack.c.b16 %v1394, %v1391
    %1491 = vmatpush.bf16.msra.mxu0 %v1416
    %1492 = vmatpush.bf16.msra.mxu0 %v1413
    %1493 = vmatpush.bf16.msra.mxu0 %v1410
    %1494 = vmatpush.bf16.msra.mxu0 %v1407
    %1495 = vmatpush.bf16.msra.mxu0 %v1404
    %1496 = vmatpush.bf16.msra.mxu0 %v1401
    %1497 = vmatpush.bf16.msra.mxu0 %v1398
    %1498 = vmatpush.bf16.msra.mxu0 %v1395
    %1499 = vmatmul.bf16.gmra.mxu0 %v1219
    %v1500 = vpop.f32.mrf.mxu0
    %v1501 = vadd.f32 %v1192, %v1500
    %v1502 = vpop.f32.mrf.mxu0
    %v1503 = vadd.f32 %v1192, %v1502
    %1504 = vmatmul.bf16.gmra.mxu0 %v1221
    %v1505 = vpop.f32.mrf.mxu0
    %v1506 = vadd.f32 %v1192, %v1505
    %v1507 = vpop.f32.mrf.mxu0
    %v1508 = vadd.f32 %v1192, %v1507
    %1509 = vmatmul.bf16.gmra.mxu0 %v1223
    %v1510 = vpop.f32.mrf.mxu0
    %v1511 = vadd.f32 %v1192, %v1510
    %v1512 = vpop.f32.mrf.mxu0
    %v1513 = vadd.f32 %v1192, %v1512
    %1514 = vmatmul.bf16.gmra.mxu0 %v1225
    %v1515 = vpop.f32.mrf.mxu0
    %v1516 = vadd.f32 %v1192, %v1515
    %v1517 = vpop.f32.mrf.mxu0
    %1518 = vdwg.mxu0
    %1519 = vmatpush.bf16.msra.mxu0 %v1440
    %1520 = vmatpush.bf16.msra.mxu0 %v1437
    %1521 = vmatpush.bf16.msra.mxu0 %v1434
    %1522 = vmatpush.bf16.msra.mxu0 %v1431
    %1523 = vmatpush.bf16.msra.mxu0 %v1428
    %1524 = vmatpush.bf16.msra.mxu0 %v1425
    %1525 = vmatpush.bf16.msra.mxu0 %v1422
    %1526 = vmatpush.bf16.msra.mxu0 %v1419
    %1527 = vmatmul.bf16.gmra.mxu0 %v1220
    %v1528 = vpop.f32.mrf.mxu0
    %v1529 = vadd.f32 %v1501, %v1528
    %v1530 = vpop.f32.mrf.mxu0
    %v1531 = vadd.f32 %v1503, %v1530
    %1532 = vmatmul.bf16.gmra.mxu0 %v1222
    %v1533 = vpop.f32.mrf.mxu0
    %v1534 = vadd.f32 %v1506, %v1533
    %v1535 = vpop.f32.mrf.mxu0
    %v1536 = vadd.f32 %v1508, %v1535
    %1537 = vmatmul.bf16.gmra.mxu0 %v1224
    %v1538 = vpop.f32.mrf.mxu0
    %v1539 = vadd.f32 %v1511, %v1538
    %v1540 = vpop.f32.mrf.mxu0
    %v1541 = vadd.f32 %v1513, %v1540
    %1542 = vmatmul.bf16.gmra.mxu0 %v1226
    %v1543 = vpop.f32.mrf.mxu0
    %v1544 = vadd.f32 %v1516, %v1543
    %v1545 = vpop.f32.mrf.mxu0
    %1546 = vdwg.mxu0
    %1547 = vmatpush.bf16.msra.mxu0 %v1417
    %1548 = vmatpush.bf16.msra.mxu0 %v1414
    %1549 = vmatpush.bf16.msra.mxu0 %v1411
    %1550 = vmatpush.bf16.msra.mxu0 %v1408
    %1551 = vmatpush.bf16.msra.mxu0 %v1405
    %1552 = vmatpush.bf16.msra.mxu0 %v1402
    %1553 = vmatpush.bf16.msra.mxu0 %v1399
    %1554 = vmatpush.bf16.msra.mxu0 %v1396
    %1555 = vmatmul.bf16.gmra.mxu0 %v1219
    %v1556 = vpop.f32.mrf.mxu0
    %v1557 = vadd.f32 %v1193, %v1556
    %v1558 = vpop.f32.mrf.mxu0
    %v1559 = vadd.f32 %v1193, %v1558
    %1560 = vmatmul.bf16.gmra.mxu0 %v1221
    %v1561 = vpop.f32.mrf.mxu0
    %v1562 = vadd.f32 %v1193, %v1561
    %v1563 = vpop.f32.mrf.mxu0
    %v1564 = vadd.f32 %v1193, %v1563
    %1565 = vmatmul.bf16.gmra.mxu0 %v1223
    %v1566 = vpop.f32.mrf.mxu0
    %v1567 = vadd.f32 %v1193, %v1566
    %v1568 = vpop.f32.mrf.mxu0
    %v1569 = vadd.f32 %v1193, %v1568
    %1570 = vmatmul.bf16.gmra.mxu0 %v1225
    %v1571 = vpop.f32.mrf.mxu0
    %v1572 = vadd.f32 %v1193, %v1571
    %v1573 = vpop.f32.mrf.mxu0
    %1574 = vdwg.mxu0
    %1575 = vmatpush.bf16.msra.mxu0 %v1441
    %1576 = vmatpush.bf16.msra.mxu0 %v1438
    %1577 = vmatpush.bf16.msra.mxu0 %v1435
    %1578 = vmatpush.bf16.msra.mxu0 %v1432
    %1579 = vmatpush.bf16.msra.mxu0 %v1429
    %1580 = vmatpush.bf16.msra.mxu0 %v1426
    %1581 = vmatpush.bf16.msra.mxu0 %v1423
    %1582 = vmatpush.bf16.msra.mxu0 %v1420
    %1583 = vmatmul.bf16.gmra.mxu0 %v1220
    %v1584 = vpop.f32.mrf.mxu0
    %v1585 = vadd.f32 %v1557, %v1584
    %v1586 = vpop.f32.mrf.mxu0
    %v1587 = vadd.f32 %v1559, %v1586
    %1588 = vmatmul.bf16.gmra.mxu0 %v1222
    %v1589 = vpop.f32.mrf.mxu0
    %v1590 = vadd.f32 %v1562, %v1589
    %v1591 = vpop.f32.mrf.mxu0
    %v1592 = vadd.f32 %v1564, %v1591
    %1593 = vmatmul.bf16.gmra.mxu0 %v1224
    %v1594 = vpop.f32.mrf.mxu0
    %v1595 = vadd.f32 %v1567, %v1594
    %v1596 = vpop.f32.mrf.mxu0
    %v1597 = vadd.f32 %v1569, %v1596
    %1598 = vmatmul.bf16.gmra.mxu0 %v1226
    %v1599 = vpop.f32.mrf.mxu0
    %v1600 = vadd.f32 %v1572, %v1599
    %v1601 = vpop.f32.mrf.mxu0
    %1602 = vdwg.mxu0
    %1603 = vmatpush.bf16.msra.mxu0 %v1418
    %1604 = vmatpush.bf16.msra.mxu0 %v1415
    %1605 = vmatpush.bf16.msra.mxu0 %v1412
    %1606 = vmatpush.bf16.msra.mxu0 %v1409
    %1607 = vmatpush.bf16.msra.mxu0 %v1406
    %1608 = vmatpush.bf16.msra.mxu0 %v1403
    %1609 = vmatpush.bf16.msra.mxu0 %v1400
    %1610 = vmatpush.bf16.msra.mxu0 %v1397
    %1611 = vmatmul.bf16.gmra.mxu0 %v1219
    %v1612 = vpop.f32.mrf.mxu0
    %v1613 = vadd.f32 %v1194, %v1612
    %v1614 = vpop.f32.mrf.mxu0
    %v1615 = vadd.f32 %v1194, %v1614
    %1616 = vmatmul.bf16.gmra.mxu0 %v1221
    %v1617 = vpop.f32.mrf.mxu0
    %v1618 = vadd.f32 %v1194, %v1617
    %v1619 = vpop.f32.mrf.mxu0
    %v1620 = vadd.f32 %v1194, %v1619
    %1621 = vmatmul.bf16.gmra.mxu0 %v1223
    %v1622 = vpop.f32.mrf.mxu0
    %v1623 = vadd.f32 %v1194, %v1622
    %v1624 = vpop.f32.mrf.mxu0
    %v1625 = vadd.f32 %v1194, %v1624
    %1626 = vmatmul.bf16.gmra.mxu0 %v1225
    %v1627 = vpop.f32.mrf.mxu0
    %v1628 = vadd.f32 %v1194, %v1627
    %v1629 = vpop.f32.mrf.mxu0
    %1630 = vdwg.mxu0
    %1631 = vmatpush.bf16.msra.mxu0 %v1442
    %1632 = vmatpush.bf16.msra.mxu0 %v1439
    %1633 = vmatpush.bf16.msra.mxu0 %v1436
    %1634 = vmatpush.bf16.msra.mxu0 %v1433
    %1635 = vmatpush.bf16.msra.mxu0 %v1430
    %1636 = vmatpush.bf16.msra.mxu0 %v1427
    %1637 = vmatpush.bf16.msra.mxu0 %v1424
    %1638 = vmatpush.bf16.msra.mxu0 %v1421
    %1639 = vmatmul.bf16.gmra.mxu0 %v1220
    %v1640 = vpop.f32.mrf.mxu0
    %v1641 = vadd.f32 %v1613, %v1640
    %v1642 = vpop.f32.mrf.mxu0
    %v1643 = vadd.f32 %v1615, %v1642
    %1644 = vmatmul.bf16.gmra.mxu0 %v1222
    %v1645 = vpop.f32.mrf.mxu0
    %v1646 = vadd.f32 %v1618, %v1645
    %v1647 = vpop.f32.mrf.mxu0
    %v1648 = vadd.f32 %v1620, %v1647
    %1649 = vmatmul.bf16.gmra.mxu0 %v1224
    %v1650 = vpop.f32.mrf.mxu0
    %v1651 = vadd.f32 %v1623, %v1650
    %v1652 = vpop.f32.mrf.mxu0
    %v1653 = vadd.f32 %v1625, %v1652
    %1654 = vmatmul.bf16.gmra.mxu0 %v1226
    %v1655 = vpop.f32.mrf.mxu0
    %v1656 = vadd.f32 %v1628, %v1655
    %v1657 = vpop.f32.mrf.mxu0
    %1658 = vdwg.mxu0
    %v1659 = vld [vmem:[#allocation3] sm:$0xff]
    %v1660 = vld [vmem:[#allocation3 + $0x8] sm:$0xff]
    %v1661 = vld [vmem:[#allocation3 + $0x10] sm:$0xff]
    %v1662 = vld [vmem:[#allocation3 + $0x18] sm:$0xff]
    %v1663 = vld [vmem:[#allocation3 + $0x20] sm:$0xff]
    %v1664 = vld [vmem:[#allocation3 + $0x28] sm:$0xff]
    %v1665 = vld [vmem:[#allocation3 + $0x30] sm:$0xff]
    %v1666 = vmax.f32 %v1529, %v1585
    %v1667 = vmax.f32 %v1666, %v1641
    %1668 = vmax.xlane.f32.xlu0 %v1667
    %v1669 = vpop.xlane.xlu0 %1668
    %v1670 = vmax.f32 %v1531, %v1587
    %v1671 = vmax.f32 %v1670, %v1643
    %1672 = vmax.xlane.f32.xlu0 %v1671
    %v1673 = vpop.xlane.xlu0 %1672
    %v1674 = vmax.f32 %v1534, %v1590
    %v1675 = vmax.f32 %v1674, %v1646
    %1676 = vmax.xlane.f32.xlu0 %v1675
    %v1677 = vpop.xlane.xlu0 %1676
    %v1678 = vmax.f32 %v1536, %v1592
    %v1679 = vmax.f32 %v1678, %v1648
    %1680 = vmax.xlane.f32.xlu0 %v1679
    %v1681 = vpop.xlane.xlu0 %1680
    %v1682 = vmax.f32 %v1539, %v1595
    %v1683 = vmax.f32 %v1682, %v1651
    %1684 = vmax.xlane.f32.xlu0 %v1683
    %v1685 = vpop.xlane.xlu0 %1684
    %v1686 = vmax.f32 %v1541, %v1597
    %v1687 = vmax.f32 %v1686, %v1653
    %1688 = vmax.xlane.f32.xlu0 %v1687
    %v1689 = vpop.xlane.xlu0 %1688
    %v1690 = vmax.f32 %v1544, %v1600
    %v1691 = vmax.f32 %v1690, %v1656
    %1692 = vmax.xlane.f32.xlu0 %v1691
    %v1693 = vpop.xlane.xlu0 %1692
    %v1694 = vmax.f32 %v1659, %v1669
    %v1695 = vmax.f32 %v1660, %v1673
    %v1696 = vmax.f32 %v1661, %v1677
    %v1697 = vmax.f32 %v1662, %v1681
    %v1698 = vmax.f32 %v1663, %v1685
    %v1699 = vmax.f32 %v1664, %v1689
    %v1700 = vmax.f32 %v1665, %v1693
    %v1701 = vld [vmem:[#allocation4] sm:$0xff]
    %v1702 = vld [vmem:[#allocation4 + $0x8] sm:$0xff]
    %v1703 = vld [vmem:[#allocation4 + $0x10] sm:$0xff]
    %v1704 = vld [vmem:[#allocation4 + $0x18] sm:$0xff]
    %v1705 = vld [vmem:[#allocation4 + $0x20] sm:$0xff]
    %v1706 = vld [vmem:[#allocation4 + $0x28] sm:$0xff]
    %v1707 = vld [vmem:[#allocation4 + $0x30] sm:$0xff]
    %v1708 = vsub.f32 %v1659, %v1694
    %v1709 = vsub.f32 %v1660, %v1695
    %v1710 = vsub.f32 %v1661, %v1696
    %v1711 = vsub.f32 %v1662, %v1697
    %v1712 = vsub.f32 %v1663, %v1698
    %v1713 = vsub.f32 %v1664, %v1699
    %v1714 = vsub.f32 %v1665, %v1700
    %v1715 = vmul.f32 %v1708, 1.442695
    %v1716 = vpow.pop %v1715
    %v1717 = vmul.f32 %v1709, 1.442695
    %v1718 = vpow.pop %v1717
    %v1719 = vmul.f32 %v1710, 1.442695
    %v1720 = vpow.pop %v1719
    %v1721 = vmul.f32 %v1711, 1.442695
    %v1722 = vpow.pop %v1721
    %v1723 = vmul.f32 %v1712, 1.442695
    %v1724 = vpow.pop %v1723
    %v1725 = vmul.f32 %v1713, 1.442695
    %v1726 = vpow.pop %v1725
    %v1727 = vmul.f32 %v1714, 1.442695
    %v1728 = vpow.pop %v1727
    %v1729 = vmul.f32 %v1701, %v1716
    %v1730 = vmul.f32 %v1702, %v1718
    %v1731 = vmul.f32 %v1703, %v1720
    %v1732 = vmul.f32 %v1704, %v1722
    %v1733 = vmul.f32 %v1705, %v1724
    %v1734 = vmul.f32 %v1706, %v1726
    %v1735 = vmul.f32 %v1707, %v1728
    %1737 = vset.pattern.permute.xlu0 0
    %1738 = vperm.xlu0 %1737, %v1694
    %v1739 = vpop.permute.xlu0 %1738
    %1742 = vset.pattern.permute.xlu0 0
    %1743 = vperm.xlu0 %1742, %v1695
    %v1744 = vpop.permute.xlu0 %1743
    %1747 = vset.pattern.permute.xlu0 0
    %1748 = vperm.xlu0 %1747, %v1696
    %v1749 = vpop.permute.xlu0 %1748
    %1752 = vset.pattern.permute.xlu0 0
    %1753 = vperm.xlu0 %1752, %v1697
    %v1754 = vpop.permute.xlu0 %1753
    %1757 = vset.pattern.permute.xlu0 0
    %1758 = vperm.xlu0 %1757, %v1698
    %v1759 = vpop.permute.xlu0 %1758
    %1762 = vset.pattern.permute.xlu0 0
    %1763 = vperm.xlu0 %1762, %v1699
    %v1764 = vpop.permute.xlu0 %1763
    %1767 = vset.pattern.permute.xlu0 0
    %1768 = vperm.xlu0 %1767, %v1700
    %v1769 = vpop.permute.xlu0 %1768
    %v1771 = vsub.f32 %v1529, %v1739
    %v1772 = vsub.f32 %v1585, %v1739
    %v1773 = vsub.f32 %v1641, %v1739
    %v1774 = vsub.f32 %v1531, %v1744
    %v1775 = vsub.f32 %v1587, %v1744
    %v1776 = vsub.f32 %v1643, %v1744
    %v1777 = vsub.f32 %v1534, %v1749
    %v1778 = vsub.f32 %v1590, %v1749
    %v1779 = vsub.f32 %v1646, %v1749
    %v1780 = vsub.f32 %v1536, %v1754
    %v1781 = vsub.f32 %v1592, %v1754
    %v1782 = vsub.f32 %v1648, %v1754
    %v1783 = vsub.f32 %v1539, %v1759
    %v1784 = vsub.f32 %v1595, %v1759
    %v1785 = vsub.f32 %v1651, %v1759
    %v1786 = vsub.f32 %v1541, %v1764
    %v1787 = vsub.f32 %v1597, %v1764
    %v1788 = vsub.f32 %v1653, %v1764
    %v1789 = vsub.f32 %v1544, %v1769
    %v1790 = vsub.f32 %v1600, %v1769
    %v1791 = vsub.f32 %v1656, %v1769
    %v1792 = vmul.f32 %v1771, 1.442695
    %v1793 = vpow.pop %v1792
    %v1794 = vmul.f32 %v1772, 1.442695
    %v1795 = vpow.pop %v1794
    %v1796 = vmul.f32 %v1773, 1.442695
    %v1797 = vpow.pop %v1796
    %v1798 = vmul.f32 %v1774, 1.442695
    %v1799 = vpow.pop %v1798
    %v1800 = vmul.f32 %v1775, 1.442695
    %v1801 = vpow.pop %v1800
    %v1802 = vmul.f32 %v1776, 1.442695
    %v1803 = vpow.pop %v1802
    %v1804 = vmul.f32 %v1777, 1.442695
    %v1805 = vpow.pop %v1804
    %v1806 = vmul.f32 %v1778, 1.442695
    %v1807 = vpow.pop %v1806
    %v1808 = vmul.f32 %v1779, 1.442695
    %v1809 = vpow.pop %v1808
    %v1810 = vmul.f32 %v1780, 1.442695
    %v1811 = vpow.pop %v1810
    %v1812 = vmul.f32 %v1781, 1.442695
    %v1813 = vpow.pop %v1812
    %v1814 = vmul.f32 %v1782, 1.442695
    %v1815 = vpow.pop %v1814
    %v1816 = vmul.f32 %v1783, 1.442695
    %v1817 = vpow.pop %v1816
    %v1818 = vmul.f32 %v1784, 1.442695
    %v1819 = vpow.pop %v1818
    %v1820 = vmul.f32 %v1785, 1.442695
    %v1821 = vpow.pop %v1820
    %v1822 = vmul.f32 %v1786, 1.442695
    %v1823 = vpow.pop %v1822
    %v1824 = vmul.f32 %v1787, 1.442695
    %v1825 = vpow.pop %v1824
    %v1826 = vmul.f32 %v1788, 1.442695
    %v1827 = vpow.pop %v1826
    %v1828 = vmul.f32 %v1789, 1.442695
    %v1829 = vpow.pop %v1828
    %v1830 = vmul.f32 %v1790, 1.442695
    %v1831 = vpow.pop %v1830
    %v1832 = vmul.f32 %v1791, 1.442695
    %v1833 = vpow.pop %v1832
    %v1834 = vadd.f32 %v1793, %v1795
    %v1835 = vadd.f32 %v1834, %v1797
    %1836 = vadd.xlane.f32.xlu0 %v1835
    %v1837 = vpop.xlane.xlu0 %1836
    %v1838 = vadd.f32 %v1799, %v1801
    %v1839 = vadd.f32 %v1838, %v1803
    %1840 = vadd.xlane.f32.xlu0 %v1839
    %v1841 = vpop.xlane.xlu0 %1840
    %v1842 = vadd.f32 %v1805, %v1807
    %v1843 = vadd.f32 %v1842, %v1809
    %1844 = vadd.xlane.f32.xlu0 %v1843
    %v1845 = vpop.xlane.xlu0 %1844
    %v1846 = vadd.f32 %v1811, %v1813
    %v1847 = vadd.f32 %v1846, %v1815
    %1848 = vadd.xlane.f32.xlu0 %v1847
    %v1849 = vpop.xlane.xlu0 %1848
    %v1850 = vadd.f32 %v1817, %v1819
    %v1851 = vadd.f32 %v1850, %v1821
    %1852 = vadd.xlane.f32.xlu0 %v1851
    %v1853 = vpop.xlane.xlu0 %1852
    %v1854 = vadd.f32 %v1823, %v1825
    %v1855 = vadd.f32 %v1854, %v1827
    %1856 = vadd.xlane.f32.xlu0 %v1855
    %v1857 = vpop.xlane.xlu0 %1856
    %v1858 = vadd.f32 %v1829, %v1831
    %v1859 = vadd.f32 %v1858, %v1833
    %1860 = vadd.xlane.f32.xlu0 %v1859
    %v1861 = vpop.xlane.xlu0 %1860
    %v1862 = vadd.f32 %v1729, %v1837
    %v1863 = vadd.f32 %v1730, %v1841
    %v1864 = vadd.f32 %v1731, %v1845
    %v1865 = vadd.f32 %v1732, %v1849
    %v1866 = vadd.f32 %v1733, %v1853
    %v1867 = vadd.f32 %v1734, %v1857
    %v1868 = vadd.f32 %v1735, %v1861
    %vm1869 = vcmask 7168
    %1870 = vst.msk [vmem:[#allocation4] sm:$0xff] %vm1869, %v1862
    %1871 = vst.msk [vmem:[#allocation4 + $0x8] sm:$0xff] %vm1869, %v1863
    %1872 = vst.msk [vmem:[#allocation4 + $0x10] sm:$0xff] %vm1869, %v1864
    %1873 = vst.msk [vmem:[#allocation4 + $0x18] sm:$0xff] %vm1869, %v1865
    %1874 = vst.msk [vmem:[#allocation4 + $0x20] sm:$0xff] %vm1869, %v1866
    %1875 = vst.msk [vmem:[#allocation4 + $0x28] sm:$0xff] %vm1869, %v1867
    %1876 = vst.msk [vmem:[#allocation4 + $0x30] sm:$0xff] %vm1869, %v1868
    %1877 = vst.msk [vmem:[#allocation3] sm:$0xff] %vm1869, %v1694
    %1878 = vst.msk [vmem:[#allocation3 + $0x8] sm:$0xff] %vm1869, %v1695
    %1879 = vst.msk [vmem:[#allocation3 + $0x10] sm:$0xff] %vm1869, %v1696
    %1880 = vst.msk [vmem:[#allocation3 + $0x18] sm:$0xff] %vm1869, %v1697
    %1881 = vst.msk [vmem:[#allocation3 + $0x20] sm:$0xff] %vm1869, %v1698
    %1882 = vst.msk [vmem:[#allocation3 + $0x28] sm:$0xff] %vm1869, %v1699
    %1883 = vst.msk [vmem:[#allocation3 + $0x30] sm:$0xff] %vm1869, %v1700
    %s1884 = smul.addr %s1114, 8
    %s1885 = scalar_lea.vmem [#allocation14], %s1884
    %1886 = vst [vmem:[%s1885] sm:$0xff] %v1529
    %1887 = vst [vmem:[%s1885 + $0x8] sm:$0xff] %v1585
    %1888 = vst [vmem:[%s1885 + $0x10] sm:$0xff] %v1641
    %1889 = vst [vmem:[%s1885 + $0x18] sm:$0xff] %v1531
    %1890 = vst [vmem:[%s1885 + $0x20] sm:$0xff] %v1587
    %1891 = vst [vmem:[%s1885 + $0x28] sm:$0xff] %v1643
    %1892 = vst [vmem:[%s1885 + $0x30] sm:$0xff] %v1534
    %1893 = vst [vmem:[%s1885 + $0x38] sm:$0xff] %v1590
    %1894 = vst [vmem:[%s1885 + $0x40] sm:$0xff] %v1646
    %1895 = vst [vmem:[%s1885 + $0x48] sm:$0xff] %v1536
    %1896 = vst [vmem:[%s1885 + $0x50] sm:$0xff] %v1592
    %1897 = vst [vmem:[%s1885 + $0x58] sm:$0xff] %v1648
    %1898 = vst [vmem:[%s1885 + $0x60] sm:$0xff] %v1539
    %1899 = vst [vmem:[%s1885 + $0x68] sm:$0xff] %v1595
    %1900 = vst [vmem:[%s1885 + $0x70] sm:$0xff] %v1651
    %1901 = vst [vmem:[%s1885 + $0x78] sm:$0xff] %v1541
    %1902 = vst [vmem:[%s1885 + $0x80] sm:$0xff] %v1597
    %1903 = vst [vmem:[%s1885 + $0x88] sm:$0xff] %v1653
    %1904 = vst [vmem:[%s1885 + $0x90] sm:$0xff] %v1544
    %1905 = vst [vmem:[%s1885 + $0x98] sm:$0xff] %v1600
    %1906 = vst [vmem:[%s1885 + $0xa0] sm:$0xff] %v1656
    // Predicated region
    $region46: #{tpu_custom_call.1} parent=1 // pred_check
      %p1907 = pneg %p97
    $region47: #{tpu_custom_call.1} parent=1 // pred_check_branch
      %1909 = sbr.rel (%p1907) target = $region49
    $region48: #{tpu_custom_call.1} parent=1 // pred_region
      %v1910 = vld [vmem:[#allocation3] sm:$0xff]
      %v1911 = vld [vmem:[#allocation3 + $0x8] sm:$0xff]
      %v1912 = vld [vmem:[#allocation3 + $0x10] sm:$0xff]
      %v1913 = vld [vmem:[#allocation3 + $0x18] sm:$0xff]
      %v1914 = vld [vmem:[#allocation3 + $0x20] sm:$0xff]
      %v1915 = vld [vmem:[#allocation3 + $0x28] sm:$0xff]
      %v1916 = vld [vmem:[#allocation3 + $0x30] sm:$0xff]
      %v1917 = vld [vmem:[#allocation4] sm:$0xff]
      %v1918 = vld [vmem:[#allocation4 + $0x8] sm:$0xff]
      %v1919 = vld [vmem:[#allocation4 + $0x10] sm:$0xff]
      %v1920 = vld [vmem:[#allocation4 + $0x18] sm:$0xff]
      %v1921 = vld [vmem:[#allocation4 + $0x20] sm:$0xff]
      %v1922 = vld [vmem:[#allocation4 + $0x28] sm:$0xff]
      %v1923 = vld [vmem:[#allocation4 + $0x30] sm:$0xff]
      %v1924 = vlog2.pop %v1917
      %v1925 = vmul.f32 %v1924, 0.6931472
      %v1926 = vlog2.pop %v1918
      %v1927 = vmul.f32 %v1926, 0.6931472
      %v1928 = vlog2.pop %v1919
      %v1929 = vmul.f32 %v1928, 0.6931472
      %v1930 = vlog2.pop %v1920
      %v1931 = vmul.f32 %v1930, 0.6931472
      %v1932 = vlog2.pop %v1921
      %v1933 = vmul.f32 %v1932, 0.6931472
      %v1934 = vlog2.pop %v1922
      %v1935 = vmul.f32 %v1934, 0.6931472
      %v1936 = vlog2.pop %v1923
      %v1937 = vmul.f32 %v1936, 0.6931472
      %v1938 = vadd.f32 %v1910, %v1925
      %v1939 = vadd.f32 %v1911, %v1927
      %v1940 = vadd.f32 %v1912, %v1929
      %v1941 = vadd.f32 %v1913, %v1931
      %v1942 = vadd.f32 %v1914, %v1933
      %v1943 = vadd.f32 %v1915, %v1935
      %v1944 = vadd.f32 %v1916, %v1937
      %v1945 = vld [vmem:[#allocation14] sm:$0xff]
      %v1946 = vld [vmem:[#allocation14 + $0x8] sm:$0xff]
      %v1947 = vld [vmem:[#allocation14 + $0x10] sm:$0xff]
      %v1948 = vld [vmem:[#allocation14 + $0x18] sm:$0xff]
      %v1949 = vld [vmem:[#allocation14 + $0x20] sm:$0xff]
      %v1950 = vld [vmem:[#allocation14 + $0x28] sm:$0xff]
      %v1951 = vld [vmem:[#allocation14 + $0x30] sm:$0xff]
      %v1952 = vld [vmem:[#allocation14 + $0x38] sm:$0xff]
      %v1953 = vld [vmem:[#allocation14 + $0x40] sm:$0xff]
      %v1954 = vld [vmem:[#allocation14 + $0x48] sm:$0xff]
      %v1955 = vld [vmem:[#allocation14 + $0x50] sm:$0xff]
      %v1956 = vld [vmem:[#allocation14 + $0x58] sm:$0xff]
      %v1957 = vld [vmem:[#allocation14 + $0x60] sm:$0xff]
      %v1958 = vld [vmem:[#allocation14 + $0x68] sm:$0xff]
      %v1959 = vld [vmem:[#allocation14 + $0x70] sm:$0xff]
      %v1960 = vld [vmem:[#allocation14 + $0x78] sm:$0xff]
      %v1961 = vld [vmem:[#allocation14 + $0x80] sm:$0xff]
      %v1962 = vld [vmem:[#allocation14 + $0x88] sm:$0xff]
      %v1963 = vld [vmem:[#allocation14 + $0x90] sm:$0xff]
      %v1964 = vld [vmem:[#allocation14 + $0x98] sm:$0xff]
      %v1965 = vld [vmem:[#allocation14 + $0xa0] sm:$0xff]
      %1967 = vset.pattern.permute.xlu0 0
      %1968 = vperm.xlu0 %1967, %v1938
      %v1969 = vpop.permute.xlu0 %1968
      %1972 = vset.pattern.permute.xlu0 0
      %1973 = vperm.xlu0 %1972, %v1939
      %v1974 = vpop.permute.xlu0 %1973
      %1977 = vset.pattern.permute.xlu0 0
      %1978 = vperm.xlu0 %1977, %v1940
      %v1979 = vpop.permute.xlu0 %1978
      %1982 = vset.pattern.permute.xlu0 0
      %1983 = vperm.xlu0 %1982, %v1941
      %v1984 = vpop.permute.xlu0 %1983
      %1987 = vset.pattern.permute.xlu0 0
      %1988 = vperm.xlu0 %1987, %v1942
      %v1989 = vpop.permute.xlu0 %1988
      %1992 = vset.pattern.permute.xlu0 0
      %1993 = vperm.xlu0 %1992, %v1943
      %v1994 = vpop.permute.xlu0 %1993
      %1997 = vset.pattern.permute.xlu0 0
      %1998 = vperm.xlu0 %1997, %v1944
      %v1999 = vpop.permute.xlu0 %1998
      %v2001 = vsub.f32 %v1945, %v1969
      %v2002 = vsub.f32 %v1946, %v1969
      %v2003 = vsub.f32 %v1947, %v1969
      %v2004 = vsub.f32 %v1948, %v1974
      %v2005 = vsub.f32 %v1949, %v1974
      %v2006 = vsub.f32 %v1950, %v1974
      %v2007 = vsub.f32 %v1951, %v1979
      %v2008 = vsub.f32 %v1952, %v1979
      %v2009 = vsub.f32 %v1953, %v1979
      %v2010 = vsub.f32 %v1954, %v1984
      %v2011 = vsub.f32 %v1955, %v1984
      %v2012 = vsub.f32 %v1956, %v1984
      %v2013 = vsub.f32 %v1957, %v1989
      %v2014 = vsub.f32 %v1958, %v1989
      %v2015 = vsub.f32 %v1959, %v1989
      %v2016 = vsub.f32 %v1960, %v1994
      %v2017 = vsub.f32 %v1961, %v1994
      %v2018 = vsub.f32 %v1962, %v1994
      %v2019 = vsub.f32 %v1963, %v1999
      %v2020 = vsub.f32 %v1964, %v1999
      %v2021 = vsub.f32 %v1965, %v1999
      %2022 = vst [vmem:[#allocation14] sm:$0xff] %v2001
      %2023 = vst [vmem:[#allocation14 + $0x8] sm:$0xff] %v2002
      %2024 = vst [vmem:[#allocation14 + $0x10] sm:$0xff] %v2003
      %2025 = vst [vmem:[#allocation14 + $0x18] sm:$0xff] %v2004
      %2026 = vst [vmem:[#allocation14 + $0x20] sm:$0xff] %v2005
      %2027 = vst [vmem:[#allocation14 + $0x28] sm:$0xff] %v2006
      %2028 = vst [vmem:[#allocation14 + $0x30] sm:$0xff] %v2007
      %2029 = vst [vmem:[#allocation14 + $0x38] sm:$0xff] %v2008
      %2030 = vst [vmem:[#allocation14 + $0x40] sm:$0xff] %v2009
      %2031 = vst [vmem:[#allocation14 + $0x48] sm:$0xff] %v2010
      %2032 = vst [vmem:[#allocation14 + $0x50] sm:$0xff] %v2011
      %2033 = vst [vmem:[#allocation14 + $0x58] sm:$0xff] %v2012
      %2034 = vst [vmem:[#allocation14 + $0x60] sm:$0xff] %v2013
      %2035 = vst [vmem:[#allocation14 + $0x68] sm:$0xff] %v2014
      %2036 = vst [vmem:[#allocation14 + $0x70] sm:$0xff] %v2015
      %2037 = vst [vmem:[#allocation14 + $0x78] sm:$0xff] %v2016
      %2038 = vst [vmem:[#allocation14 + $0x80] sm:$0xff] %v2017
      %2039 = vst [vmem:[#allocation14 + $0x88] sm:$0xff] %v2018
      %2040 = vst [vmem:[#allocation14 + $0x90] sm:$0xff] %v2019
      %2041 = vst [vmem:[#allocation14 + $0x98] sm:$0xff] %v2020
      %2042 = vst [vmem:[#allocation14 + $0xa0] sm:$0xff] %v2021
    $region49: #{tpu_custom_call.1} parent=1 // pred_fallthru
      _
    // Predicated region
    $region50: #{tpu_custom_call.1} parent=1 // pred_check
      _
    $region51: #{tpu_custom_call.1} parent=1 // pred_check_branch
      %2044 = sbr.rel (0) target = $region53
    $region52: #{tpu_custom_call.1} parent=1 // pred_region
      %2046 = vsyncadd [#allocation7], 0
      %s2047 = sshll.u32 [#allocation14], 4
      %s2048 = int_to_ptr.vmem [resolvable:$true] %s2047
      %s2049 = sshll.u32 %s5, 4
      %s2050 = int_to_ptr.hbm [resolvable:$true] %s2049
      %2055 = dma.vmem_to_hbm [thread:$0]  %s2048, 2688, %s2050, [#allocation7], 384, 384, 24
    $region53: #{tpu_custom_call.1} parent=1 // pred_fallthru
      _
    // Predicated region
    $region54: #{tpu_custom_call.1} parent=1 // pred_check
      _
    $region55: #{tpu_custom_call.1} parent=1 // pred_check_branch
      %2057 = sbr.rel (0) target = $region57
    $region56: #{tpu_custom_call.1} parent=1 // pred_region
      %2059 = dma.done [#allocation7], 2688
    $region57: #{tpu_custom_call.1} parent=1 // pred_fallthru
      _
    %2060 = vsyncpa [#allocation6], 1
    %2061 = vsyncpa [#allocation9], 1
    %2062 = vsyncpa [#allocation12], 1
    %2063 = vsyncpa [#allocation7], 1

</llo_original>
